<compile_context>
chip_gen: v5e
topology: v5e:2x2
jax: 0.10.0
libtpu: 0.0.40
codegen_flags: <defaults>
</compile_context>

<pallas_src>
import functools

import jax
import jax.numpy as jnp
import numpy as np
from jax.experimental import pallas as pl
from jax.experimental.pallas import tpu as pltpu


def _wsconv_band_kernel(x_ref, w_ref, b_ref, o_ref, *, kh, kw, neg_slope):
    """One (batch, row-band) tile of WSConv2d (+ fused bias and LeakyReLU).

    x_ref : (1, 1, TH+kh-1, Wp, Cin)  bf16 padded input band          (VMEM)
    w_ref : (kh*kw, Cin, Cout)        bf16 taps, WS scale pre-folded  (VMEM)
    b_ref : (1, Cout)                 f32 bias                        (VMEM)
    o_ref : (1, 1, TH, W, Cout)       output tile                     (VMEM)
    """
    th = o_ref.shape[2]
    w_out = o_ref.shape[3]
    cout = o_ref.shape[4]
    cin = x_ref.shape[4]

    x = x_ref[0, 0]  # (TH+kh-1, Wp, Cin) bf16

    # f32 accumulator initialized with the bias (saves a separate full add).
    # Local value (not a VMEM scratch): lives in vregs when it fits, so the
    # per-tap accumulation avoids explicit VMEM load/store round trips.
    acc = jnp.broadcast_to(b_ref[...], (th * w_out, cout))

    # Direct conv: one MXU matmul (TH*W, Cin) @ (Cin, Cout) per tap, f32 acc.
    # TODO(synk): for small Cin the kw taps could be concatenated into one
    # deeper matmul (contraction kw*Cin) to cut MXU pushes, at the cost of an
    # im2col-style copy of the band; for real ProGAN layers (Cin >= 128) the
    # per-tap contraction already fills the MXU.
    for i in range(kh):
        for j in range(kw):
            patch = x[i:i + th, j:j + w_out, :].reshape(th * w_out, cin)
            acc = acc + jnp.dot(patch, w_ref[i * kw + j],
                                preferred_element_type=jnp.float32)

    if neg_slope is not None:
        acc = jnp.where(acc >= 0, acc, acc * jnp.float32(neg_slope))  # LeakyReLU
    # TODO(synk): for Cout < 128 this store is lane-sparse; folding W into the
    # lane axis (TH, W*Cout) would make it dense but needs a minor-dim
    # relayout.  Real ProGAN layers (Cout >= 128) are already lane-dense.
    o_ref[...] = acc.reshape(1, 1, th, w_out, cout).astype(o_ref.dtype)


def _pick_tile_rows(h, wp, cin, w, cout, budget_bytes=6 << 20):
    """Rows per tile so 2x(bf16 band) + 2x(out) + f32 accumulator fit budget."""
    per_row = 2 * (wp * cin * 2) + 3 * (w * cout * 4)
    th = budget_bytes // max(per_row, 1)
    th = max(8, (th // 8) * 8)
    return int(min(h, th))


def wsconv2d_nhwc(x_nhwc, weight_oihw, bias, *, leaky_slope=None,
                  out_dtype=jnp.float32, compute_dtype=jnp.bfloat16):
    """Weight-scaled KxK conv, stride=1, 'same' padding, NHWC in/out,
    fused bias add and optional LeakyReLU."""
    n, h, w, cin = x_nhwc.shape
    cout, cin_w, kh, kw = weight_oihw.shape
    assert cin == cin_w
    assert kh == kw and kh % 2 == 1, "odd square kernels only"
    # TODO(synk): only stride=1 / 'same' padding (the module's configuration).
    pad = (kh - 1) // 2
    halo = kh - 1

    scale = (2.0 / (cin * kh * kw)) ** 0.5
    # Fold the WS scale into the (tiny) weights: conv(x*s, W) == conv(x, s*W).
    w_taps = (jnp.transpose(weight_oihw, (2, 3, 1, 0)).reshape(kh * kw, cin, cout)
              * scale).astype(compute_dtype)
    b2d = bias.reshape(1, cout).astype(jnp.float32)

    wp = w + 2 * pad
    th = _pick_tile_rows(h, wp, cin, w, cout)
    n_t = -(-h // th)  # ceil

    # Spatial pad (bottom padded so n_t*th output rows are coverable) and
    # overlapping row bands so the Pallas grid blocks do not overlap.
    # XLA fuses pad + slice + stack into a single pass over the activation.
    pad_bottom = n_t * th - h + pad
    xp = jnp.pad(x_nhwc.astype(compute_dtype),
                 ((0, 0), (pad, pad_bottom), (pad, pad), (0, 0)))
    bands = jnp.stack([xp[:, t * th: t * th + th + halo] for t in range(n_t)],
                      axis=1)  # (N, nT, TH+halo, Wp, Cin)

    flops = 2 * n * n_t * th * w * kh * kw * cin * cout
    bytes_accessed = int(bands.size * bands.dtype.itemsize
                         + w_taps.size * w_taps.dtype.itemsize
                         + n * n_t * th * w * cout * jnp.dtype(out_dtype).itemsize)

    out = pl.pallas_call(
        functools.partial(_wsconv_band_kernel, kh=kh, kw=kw, neg_slope=leaky_slope),
        out_shape=jax.ShapeDtypeStruct((n, n_t, th, w, cout), out_dtype),
        grid_spec=pltpu.PrefetchScalarGridSpec(
            num_scalar_prefetch=0,
            grid=(n, n_t),
            in_specs=[
                pl.BlockSpec((1, 1, th + halo, wp, cin),
                             lambda b, t: (b, t, 0, 0, 0)),
                pl.BlockSpec((kh * kw, cin, cout), lambda b, t: (0, 0, 0)),
                pl.BlockSpec((1, cout), lambda b, t: (0, 0)),
            ],
            out_specs=pl.BlockSpec((1, 1, th, w, cout),
                                   lambda b, t: (b, t, 0, 0, 0)),
        ),
        compiler_params=pltpu.CompilerParams(
            # Batch and row-tile axes are independent: shard across the two
            # TensorCores on v7x; harmless on v5e/v6e.
            dimension_semantics=("parallel", "parallel"),
            # Tiles are budgeted to ~6 MiB; 32 MiB leaves headroom and still
            # fits v7x's 64 MiB physical VMEM.
            vmem_limit_bytes=32 * 1024 * 1024,
        ),
        cost_estimate=pl.CostEstimate(flops=flops, transcendentals=0,
                                      bytes_accessed=bytes_accessed),
    )(bands, w_taps, b2d)

    out = out.reshape(n, n_t * th, w, cout)[:, :h]  # drop bottom-pad rows
    return out


def conv_block(x_nchw, w1, b1, w2, b2, *, leaky_slope=0.2):
    """ConvBlock.forward: leaky(wsconv2(leaky(wsconv1(x)))). NCHW in/out."""
    x = jnp.transpose(x_nchw, (0, 2, 3, 1))  # NCHW -> NHWC (once per block)
    y = wsconv2d_nhwc(x, w1, b1, leaky_slope=leaky_slope,
                      out_dtype=jnp.bfloat16)       # intermediate stays bf16
    y = wsconv2d_nhwc(y, w2, b2, leaky_slope=leaky_slope,
                      out_dtype=jnp.float32)
    return jnp.transpose(y, (0, 3, 1, 2))    # NHWC -> NCHW (once per block)


def _conv_block_ref(x, w1, b1, w2, b2, slope=0.2):
    """Plain-JAX f32 reference with the module's exact semantics."""
    def ws(x, w, b):
        cin, k = w.shape[1], w.shape[2]
        s = (2.0 / (cin * k * k)) ** 0.5
        y = jax.lax.conv_general_dilated(
            x * s, w, window_strides=(1, 1), padding=((1, 1), (1, 1)),
            dimension_numbers=("NCHW", "OIHW", "NCHW"))
        return y + b.reshape(1, -1, 1, 1)

    y = ws(x, w1, b1)
    y = jnp.where(y >= 0, y, slope * y)
    y = ws(y, w2, b2)
    return jnp.where(y >= 0, y, slope * y)


if __name__ == "__main__":
    # ConvBlock(in_channels=4, out_channels=8): two 3x3 WSConv2d + LeakyReLU(0.2).
    N, CIN, COUT, H, W, K = 2, 4, 8, 16, 16, 3

    key = jax.random.PRNGKey(0)
    kx, kw1, kw2, kb1, kb2 = jax.random.split(key, 5)
    x = jax.random.normal(kx, (N, CIN, H, W), dtype=jnp.float32)           # NCHW
    w1 = jax.random.normal(kw1, (COUT, CIN, K, K), dtype=jnp.float32)      # nn.init.normal_
    w2 = jax.random.normal(kw2, (COUT, COUT, K, K), dtype=jnp.float32)
    # The module inits biases to zero; small nonzero values here so the fused
    # bias-add path is actually exercised by the numerical check.
    b1 = 0.1 * jax.random.normal(kb1, (COUT,), dtype=jnp.float32)
    b2 = 0.1 * jax.random.normal(kb2, (COUT,), dtype=jnp.float32)

    out = jax.block_until_ready(conv_block(x, w1, b1, w2, b2))
    assert out.shape == (N, COUT, H, W), out.shape

    ref = _conv_block_ref(x, w1, b1, w2, b2)
    # bf16 matmul operands (f32 accumulation) -> loosened tolerance vs f32 ref.
    np.testing.assert_allclose(np.asarray(out), np.asarray(ref),
                               atol=5e-2, rtol=5e-2)

    print("KERNEL_OK")
</pallas_src>

<mosaic_0001>
module attributes {stable_mosaic.version = 11 : i64} {
  func.func @_wsconv_band_kernel(%arg0: i32, %arg1: i32, %arg2: memref<1x1x18x18x4xbf16, #tpu.memory_space<vmem>>, %arg3: memref<9x4x8xbf16, #tpu.memory_space<vmem>>, %arg4: memref<1x8xf32, #tpu.memory_space<vmem>>, %arg5: memref<1x1x16x16x8xbf16, #tpu.memory_space<vmem>>) attributes {dimension_semantics = [#tpu.dimension_semantics<parallel>, #tpu.dimension_semantics<parallel>], iteration_bounds = array<i64: 2, 1>, scalar_prefetch = 0 : i64, scratch_operands = 0 : i64, tpu.core_type = #tpu.core_type<tc>, window_params = [{transform_indices = @transform_0, window_bounds = array<i64: 1, 1, 18, 18, 4>}, {pipeline_mode = #tpu.pipeline_mode<synchronous>, transform_indices = @transform_1, window_bounds = array<i64: 9, 4, 8>}, {pipeline_mode = #tpu.pipeline_mode<synchronous>, transform_indices = @transform_2, window_bounds = array<i64: 1, 8>}, {transform_indices = @transform_3, window_bounds = array<i64: 1, 1, 16, 16, 8>}]} {
    %c0 = arith.constant 0 : index
    %c0_0 = arith.constant 0 : index
    %c0_1 = arith.constant 0 : index
    %c0_2 = arith.constant 0 : index
    %c0_3 = arith.constant 0 : index
    %0 = vector.load %arg2[%c0, %c0_0, %c0_1, %c0_2, %c0_3] : memref<1x1x18x18x4xbf16, #tpu.memory_space<vmem>>, vector<1x1x18x18x4xbf16>
    %1 = vector.shape_cast %0 : vector<1x1x18x18x4xbf16> to vector<18x18x4xbf16>
    %c0_4 = arith.constant 0 : index
    %c0_5 = arith.constant 0 : index
    %2 = vector.load %arg4[%c0_4, %c0_5] : memref<1x8xf32, #tpu.memory_space<vmem>>, vector<1x8xf32>
    %3 = vector.shape_cast %2 : vector<1x8xf32> to vector<1x8xf32>
    %4 = vector.broadcast %3 : vector<1x8xf32> to vector<256x8xf32>
    %5 = vector.extract_strided_slice %1 {offsets = [0, 0, 0], sizes = [16, 16, 4], strides = [1, 1, 1]} : vector<18x18x4xbf16> to vector<16x16x4xbf16>
    %6 = vector.shape_cast %5 : vector<16x16x4xbf16> to vector<256x4xbf16>
    %c0_6 = arith.constant 0 : index
    %c0_7 = arith.constant 0 : index
    %c0_8 = arith.constant 0 : index
    %7 = vector.load %arg3[%c0_6, %c0_7, %c0_8] : memref<9x4x8xbf16, #tpu.memory_space<vmem>>, vector<1x4x8xbf16>
    %8 = vector.shape_cast %7 : vector<1x4x8xbf16> to vector<4x8xbf16>
    %cst = arith.constant dense<0.000000e+00> : vector<256x8xf32>
    %9 = tpu.matmul %6, %8, %cst {dimension_numbers = #tpu.dot_dimension_numbers<[1], [0], [0], [1], [0, 0, 1, 1], [], []>} : vector<256x4xbf16>, vector<4x8xbf16>, vector<256x8xf32> -> vector<256x8xf32>
    %10 = arith.addf %4, %9 : vector<256x8xf32>
    %11 = vector.extract_strided_slice %1 {offsets = [0, 1, 0], sizes = [16, 16, 4], strides = [1, 1, 1]} : vector<18x18x4xbf16> to vector<16x16x4xbf16>
    %12 = vector.shape_cast %11 : vector<16x16x4xbf16> to vector<256x4xbf16>
    %c1 = arith.constant 1 : index
    %c0_9 = arith.constant 0 : index
    %c0_10 = arith.constant 0 : index
    %13 = vector.load %arg3[%c1, %c0_9, %c0_10] : memref<9x4x8xbf16, #tpu.memory_space<vmem>>, vector<1x4x8xbf16>
    %14 = vector.shape_cast %13 : vector<1x4x8xbf16> to vector<4x8xbf16>
    %cst_11 = arith.constant dense<0.000000e+00> : vector<256x8xf32>
    %15 = tpu.matmul %12, %14, %cst_11 {dimension_numbers = #tpu.dot_dimension_numbers<[1], [0], [0], [1], [0, 0, 1, 1], [], []>} : vector<256x4xbf16>, vector<4x8xbf16>, vector<256x8xf32> -> vector<256x8xf32>
    %16 = arith.addf %10, %15 : vector<256x8xf32>
    %17 = vector.extract_strided_slice %1 {offsets = [0, 2, 0], sizes = [16, 16, 4], strides = [1, 1, 1]} : vector<18x18x4xbf16> to vector<16x16x4xbf16>
    %18 = vector.shape_cast %17 : vector<16x16x4xbf16> to vector<256x4xbf16>
    %c2 = arith.constant 2 : index
    %c0_12 = arith.constant 0 : index
    %c0_13 = arith.constant 0 : index
    %19 = vector.load %arg3[%c2, %c0_12, %c0_13] : memref<9x4x8xbf16, #tpu.memory_space<vmem>>, vector<1x4x8xbf16>
    %20 = vector.shape_cast %19 : vector<1x4x8xbf16> to vector<4x8xbf16>
    %cst_14 = arith.constant dense<0.000000e+00> : vector<256x8xf32>
    %21 = tpu.matmul %18, %20, %cst_14 {dimension_numbers = #tpu.dot_dimension_numbers<[1], [0], [0], [1], [0, 0, 1, 1], [], []>} : vector<256x4xbf16>, vector<4x8xbf16>, vector<256x8xf32> -> vector<256x8xf32>
    %22 = arith.addf %16, %21 : vector<256x8xf32>
    %23 = vector.extract_strided_slice %1 {offsets = [1, 0, 0], sizes = [16, 16, 4], strides = [1, 1, 1]} : vector<18x18x4xbf16> to vector<16x16x4xbf16>
    %24 = vector.shape_cast %23 : vector<16x16x4xbf16> to vector<256x4xbf16>
    %c3 = arith.constant 3 : index
    %c0_15 = arith.constant 0 : index
    %c0_16 = arith.constant 0 : index
    %25 = vector.load %arg3[%c3, %c0_15, %c0_16] : memref<9x4x8xbf16, #tpu.memory_space<vmem>>, vector<1x4x8xbf16>
    %26 = vector.shape_cast %25 : vector<1x4x8xbf16> to vector<4x8xbf16>
    %cst_17 = arith.constant dense<0.000000e+00> : vector<256x8xf32>
    %27 = tpu.matmul %24, %26, %cst_17 {dimension_numbers = #tpu.dot_dimension_numbers<[1], [0], [0], [1], [0, 0, 1, 1], [], []>} : vector<256x4xbf16>, vector<4x8xbf16>, vector<256x8xf32> -> vector<256x8xf32>
    %28 = arith.addf %22, %27 : vector<256x8xf32>
    %29 = vector.extract_strided_slice %1 {offsets = [1, 1, 0], sizes = [16, 16, 4], strides = [1, 1, 1]} : vector<18x18x4xbf16> to vector<16x16x4xbf16>
    %30 = vector.shape_cast %29 : vector<16x16x4xbf16> to vector<256x4xbf16>
    %c4 = arith.constant 4 : index
    %c0_18 = arith.constant 0 : index
    %c0_19 = arith.constant 0 : index
    %31 = vector.load %arg3[%c4, %c0_18, %c0_19] : memref<9x4x8xbf16, #tpu.memory_space<vmem>>, vector<1x4x8xbf16>
    %32 = vector.shape_cast %31 : vector<1x4x8xbf16> to vector<4x8xbf16>
    %cst_20 = arith.constant dense<0.000000e+00> : vector<256x8xf32>
    %33 = tpu.matmul %30, %32, %cst_20 {dimension_numbers = #tpu.dot_dimension_numbers<[1], [0], [0], [1], [0, 0, 1, 1], [], []>} : vector<256x4xbf16>, vector<4x8xbf16>, vector<256x8xf32> -> vector<256x8xf32>
    %34 = arith.addf %28, %33 : vector<256x8xf32>
    %35 = vector.extract_strided_slice %1 {offsets = [1, 2, 0], sizes = [16, 16, 4], strides = [1, 1, 1]} : vector<18x18x4xbf16> to vector<16x16x4xbf16>
    %36 = vector.shape_cast %35 : vector<16x16x4xbf16> to vector<256x4xbf16>
    %c5 = arith.constant 5 : index
    %c0_21 = arith.constant 0 : index
    %c0_22 = arith.constant 0 : index
    %37 = vector.load %arg3[%c5, %c0_21, %c0_22] : memref<9x4x8xbf16, #tpu.memory_space<vmem>>, vector<1x4x8xbf16>
    %38 = vector.shape_cast %37 : vector<1x4x8xbf16> to vector<4x8xbf16>
    %cst_23 = arith.constant dense<0.000000e+00> : vector<256x8xf32>
    %39 = tpu.matmul %36, %38, %cst_23 {dimension_numbers = #tpu.dot_dimension_numbers<[1], [0], [0], [1], [0, 0, 1, 1], [], []>} : vector<256x4xbf16>, vector<4x8xbf16>, vector<256x8xf32> -> vector<256x8xf32>
    %40 = arith.addf %34, %39 : vector<256x8xf32>
    %41 = vector.extract_strided_slice %1 {offsets = [2, 0, 0], sizes = [16, 16, 4], strides = [1, 1, 1]} : vector<18x18x4xbf16> to vector<16x16x4xbf16>
    %42 = vector.shape_cast %41 : vector<16x16x4xbf16> to vector<256x4xbf16>
    %c6 = arith.constant 6 : index
    %c0_24 = arith.constant 0 : index
    %c0_25 = arith.constant 0 : index
    %43 = vector.load %arg3[%c6, %c0_24, %c0_25] : memref<9x4x8xbf16, #tpu.memory_space<vmem>>, vector<1x4x8xbf16>
    %44 = vector.shape_cast %43 : vector<1x4x8xbf16> to vector<4x8xbf16>
    %cst_26 = arith.constant dense<0.000000e+00> : vector<256x8xf32>
    %45 = tpu.matmul %42, %44, %cst_26 {dimension_numbers = #tpu.dot_dimension_numbers<[1], [0], [0], [1], [0, 0, 1, 1], [], []>} : vector<256x4xbf16>, vector<4x8xbf16>, vector<256x8xf32> -> vector<256x8xf32>
    %46 = arith.addf %40, %45 : vector<256x8xf32>
    %47 = vector.extract_strided_slice %1 {offsets = [2, 1, 0], sizes = [16, 16, 4], strides = [1, 1, 1]} : vector<18x18x4xbf16> to vector<16x16x4xbf16>
    %48 = vector.shape_cast %47 : vector<16x16x4xbf16> to vector<256x4xbf16>
    %c7 = arith.constant 7 : index
    %c0_27 = arith.constant 0 : index
    %c0_28 = arith.constant 0 : index
    %49 = vector.load %arg3[%c7, %c0_27, %c0_28] : memref<9x4x8xbf16, #tpu.memory_space<vmem>>, vector<1x4x8xbf16>
    %50 = vector.shape_cast %49 : vector<1x4x8xbf16> to vector<4x8xbf16>
    %cst_29 = arith.constant dense<0.000000e+00> : vector<256x8xf32>
    %51 = tpu.matmul %48, %50, %cst_29 {dimension_numbers = #tpu.dot_dimension_numbers<[1], [0], [0], [1], [0, 0, 1, 1], [], []>} : vector<256x4xbf16>, vector<4x8xbf16>, vector<256x8xf32> -> vector<256x8xf32>
    %52 = arith.addf %46, %51 : vector<256x8xf32>
    %53 = vector.extract_strided_slice %1 {offsets = [2, 2, 0], sizes = [16, 16, 4], strides = [1, 1, 1]} : vector<18x18x4xbf16> to vector<16x16x4xbf16>
    %54 = vector.shape_cast %53 : vector<16x16x4xbf16> to vector<256x4xbf16>
    %c8 = arith.constant 8 : index
    %c0_30 = arith.constant 0 : index
    %c0_31 = arith.constant 0 : index
    %55 = vector.load %arg3[%c8, %c0_30, %c0_31] : memref<9x4x8xbf16, #tpu.memory_space<vmem>>, vector<1x4x8xbf16>
    %56 = vector.shape_cast %55 : vector<1x4x8xbf16> to vector<4x8xbf16>
    %cst_32 = arith.constant dense<0.000000e+00> : vector<256x8xf32>
    %57 = tpu.matmul %54, %56, %cst_32 {dimension_numbers = #tpu.dot_dimension_numbers<[1], [0], [0], [1], [0, 0, 1, 1], [], []>} : vector<256x4xbf16>, vector<4x8xbf16>, vector<256x8xf32> -> vector<256x8xf32>
    %58 = arith.addf %52, %57 : vector<256x8xf32>
    %cst_33 = arith.constant 0.000000e+00 : f32
    %59 = vector.broadcast %cst_33 : f32 to vector<256x8xf32>
    %60 = arith.cmpf oge, %58, %59 : vector<256x8xf32>
    %cst_34 = arith.constant 2.000000e-01 : f32
    %61 = vector.broadcast %cst_34 : f32 to vector<256x8xf32>
    %62 = arith.mulf %58, %61 : vector<256x8xf32>
    %63 = arith.select %60, %58, %62 : vector<256x8xi1>, vector<256x8xf32>
    %64 = vector.shape_cast %63 : vector<256x8xf32> to vector<1x1x16x16x8xf32>
    %65 = arith.truncf %64 : vector<1x1x16x16x8xf32> to vector<1x1x16x16x8xbf16>
    %c0_35 = arith.constant 0 : index
    %c0_36 = arith.constant 0 : index
    %c0_37 = arith.constant 0 : index
    %c0_38 = arith.constant 0 : index
    %c0_39 = arith.constant 0 : index
    %66 = vector.load %arg5[%c0_35, %c0_36, %c0_37, %c0_38, %c0_39] : memref<1x1x16x16x8xbf16, #tpu.memory_space<vmem>>, vector<1x1x16x16x8xbf16>
    tpu.vector_store %arg5[%c0_35, %c0_36, %c0_37, %c0_38, %c0_39], %65 {strides = array<i32>} : memref<1x1x16x16x8xbf16, #tpu.memory_space<vmem>>, vector<1x1x16x16x8xbf16>,
    return
  }
  func.func @transform_0(%arg0: i32, %arg1: i32) -> (i32, i32, i32, i32, i32) {
    %c0_i32 = arith.constant 0 : i32
    %c0_i32_0 = arith.constant 0 : i32
    %c0_i32_1 = arith.constant 0 : i32
    %c0_i32_2 = arith.constant 0 : i32
    return %arg0, %arg1, %c0_i32, %c0_i32_0, %c0_i32_1 : i32, i32, i32, i32, i32
  }
  func.func @transform_1(%arg0: i32, %arg1: i32) -> (i32, i32, i32) {
    %c0_i32 = arith.constant 0 : i32
    %c0_i32_0 = arith.constant 0 : i32
    %c0_i32_1 = arith.constant 0 : i32
    %c0_i32_2 = arith.constant 0 : i32
    return %c0_i32, %c0_i32_0, %c0_i32_1 : i32, i32, i32
  }
  func.func @transform_2(%arg0: i32, %arg1: i32) -> (i32, i32) {
    %c0_i32 = arith.constant 0 : i32
    %c0_i32_0 = arith.constant 0 : i32
    %c0_i32_1 = arith.constant 0 : i32
    return %c0_i32, %c0_i32_0 : i32, i32
  }
  func.func @transform_3(%arg0: i32, %arg1: i32) -> (i32, i32, i32, i32, i32) {
    %c0_i32 = arith.constant 0 : i32
    %c0_i32_0 = arith.constant 0 : i32
    %c0_i32_1 = arith.constant 0 : i32
    %c0_i32_2 = arith.constant 0 : i32
    return %arg0, %arg1, %c0_i32, %c0_i32_0, %c0_i32_1 : i32, i32, i32, i32, i32
  }
}

</mosaic_0001>

<llo_original>
// kernel: tpu_custom_call.1
$region0: #{tpu_custom_call.1}
  #allocation0 [shape = 'u32[]', space=smem, size = 0x4, offset = 0x4, fixed_abs, tag = 'smem constant byte address 0x4 - core index']
  #allocation1 [shape = 'u32[72,128]{1,0:T(1,128)}', space=vmem, size = 0x9000, scoped, tag = 'internal scratch']
  %s0 = inlined_call_operand.vmem [shape: bf16[2,1,18,18,4], index: 0, kind: input, shape index: {}]
  %s1 = inlined_call_operand.vmem [shape: bf16[9,4,8], index: 1, kind: input, shape index: {}]
  %s2 = inlined_call_operand.vmem [shape: f32[1,8], index: 2, kind: input, shape index: {}]
  %s3 = inlined_call_operand.vmem [shape: bf16[2,1,16,16,8], index: 3, kind: output, shape index: {}]
  %s4 = sld [smem:[#allocation0]]
  $region45: #{tpu_custom_call.1} parent=0
    _
  %s6 = ssub.s32 1, %s4
  %s7 = scalar_select 0, %s6, %s4
  loop: start=0, step=1, limit=4
  $region2: #{tpu_custom_call.1} parent=0 // loop_pre_header
    _
  $region3: #{tpu_custom_call.1} parent=0 // loop_header
    %s9 = sphi 0, %s13
    %p10 = scmp.ge.s32.totalorder %s9, 4
    %s16 = sphi 0, %s28
    %s17 = sphi 0, %s24
    %s18 = sphi 0, %s16
    %s19 = sphi 0, %s17
    %s20 = sphi 0, %s18
    %s21 = sphi 0, %s19
    %s33 = sphi 0, %s35
    %s36 = sphi 0, %s33
    %s37 = sphi 0, %s36
    %s53 = sphi 0, %s37
    %s57 = sphi 0, %s57
    %s59 = sphi 0, %s57
    %s60 = sphi 0, %s59
    %s74 = sphi 0, %s60
    %s78 = sphi 0, %s78
    %s80 = sphi 0, %s78
    %s81 = sphi 0, %s80
    %s95 = sphi 0, %s81
    %s103 = sphi 0, %s105
    %s106 = sphi 0, %s103
    %s107 = sphi 0, %s106
    %s123 = sphi 0, %s107
  $region4: #{tpu_custom_call.1} parent=0 // loop_header_branch
    %12 = sbr.rel (%p10) target = $region8
  $region5: #{tpu_custom_call.1} parent=0 // loop_body
    %s14 = ssub.s32 %s9, 1
    %s15 = ssub.s32 %s9, 2
    %s22 = sadd.s32 1, %s17
    %p23 = scmp.ge.s32.totalorder %s22, 1
    %s24 = scalar_select %p23, 0, %s22
    %s25 = sadd.s32 1, %s16
    %s26 = scalar_select %p23, %s25, %s16
    %p27 = scmp.ge.s32.totalorder %s26, 2
    %s28 = scalar_select %p27, 0, %s26
    %s29 = ssub.s32 %s16, %s28
    %s30 = ssub.s32 %s17, %s24
    %s31 = sor.u32 %s29, %s30
    %p32 = scmp.eq.s32.totalorder %s31, 0
    %s34 = sadd.s32 %s33, 1
    %s35 = scalar_select %p32, %s33, %s34
    %p38 = pneg %p32
    %p39 = scmp.eq.s32.totalorder %s9, 1
    %p40 = por %p38, %p39
    %p41 = scmp.ne.s32.totalorder %s33, %s36
    %p42 = scmp.eq.s32.totalorder %s9, 0
    %p43 = por %p41, %p42
    %p44 = scmp.ne.s32.totalorder %s33, %s36
    %p45 = scmp.eq.s32.totalorder %s14, 1
    %p46 = por %p44, %p45
    %p47 = scmp.ne.s32.totalorder %s36, %s37
    %p48 = scmp.eq.s32.totalorder %s14, 0
    %p49 = por %p47, %p48
    %p50 = scmp.ne.s32.totalorder %s36, %s37
    %p51 = scmp.eq.s32.totalorder %s15, 1
    %p52 = por %p50, %p51
    %p54 = scmp.ne.s32.totalorder %s37, %s53
    %p55 = scmp.eq.s32.totalorder %s15, 0
    %p56 = por %p54, %p55
    %s58 = sadd.s32 %s57, 1
    %p61 = scmp.eq.s32.totalorder %s9, 1
    %p62 = scmp.ne.s32.totalorder %s57, %s59
    %p63 = scmp.eq.s32.totalorder %s9, 0
    %p64 = por %p62, %p63
    %p65 = scmp.ne.s32.totalorder %s57, %s59
    %p66 = scmp.eq.s32.totalorder %s14, 1
    %p67 = por %p65, %p66
    %p68 = scmp.ne.s32.totalorder %s59, %s60
    %p69 = scmp.eq.s32.totalorder %s14, 0
    %p70 = por %p68, %p69
    %p71 = scmp.ne.s32.totalorder %s59, %s60
    %p72 = scmp.eq.s32.totalorder %s15, 1
    %p73 = por %p71, %p72
    %p75 = scmp.ne.s32.totalorder %s60, %s74
    %p76 = scmp.eq.s32.totalorder %s15, 0
    %p77 = por %p75, %p76
    %s79 = sadd.s32 %s78, 1
    %p82 = scmp.eq.s32.totalorder %s9, 1
    %p83 = scmp.ne.s32.totalorder %s78, %s80
    %p84 = scmp.eq.s32.totalorder %s9, 0
    %p85 = por %p83, %p84
    %p86 = scmp.ne.s32.totalorder %s78, %s80
    %p87 = scmp.eq.s32.totalorder %s14, 1
    %p88 = por %p86, %p87
    %p89 = scmp.ne.s32.totalorder %s80, %s81
    %p90 = scmp.eq.s32.totalorder %s14, 0
    %p91 = por %p89, %p90
    %p92 = scmp.ne.s32.totalorder %s80, %s81
    %p93 = scmp.eq.s32.totalorder %s15, 1
    %p94 = por %p92, %p93
    %p96 = scmp.ne.s32.totalorder %s81, %s95
    %p97 = scmp.eq.s32.totalorder %s15, 0
    %p98 = por %p96, %p97
    %s99 = ssub.s32 %s16, %s28
    %s100 = ssub.s32 %s17, %s24
    %s101 = sor.u32 %s99, %s100
    %p102 = scmp.eq.s32.totalorder %s101, 0
    %s104 = sadd.s32 %s103, 1
    %s105 = scalar_select %p102, %s103, %s104
    %p108 = pneg %p102
    %p109 = scmp.eq.s32.totalorder %s9, 1
    %p110 = por %p108, %p109
    %p111 = scmp.ne.s32.totalorder %s103, %s106
    %p112 = scmp.eq.s32.totalorder %s9, 0
    %p113 = por %p111, %p112
    %p114 = scmp.ne.s32.totalorder %s103, %s106
    %p115 = scmp.eq.s32.totalorder %s14, 1
    %p116 = por %p114, %p115
    %p117 = scmp.ne.s32.totalorder %s106, %s107
    %p118 = scmp.eq.s32.totalorder %s14, 0
    %p119 = por %p117, %p118
    %p120 = scmp.ne.s32.totalorder %s106, %s107
    %p121 = scmp.eq.s32.totalorder %s15, 1
    %p122 = por %p120, %p121
    %p124 = scmp.ne.s32.totalorder %s107, %s123
    %p125 = scmp.eq.s32.totalorder %s15, 0
    %p126 = por %p124, %p125
    %p127 = scmp.le.s32.totalorder 1, %s9
    %p128 = scmp.lt.s32.totalorder %s9, 3
    %p129 = pnand %p127, %p128
    %p130 = pneg %p129
    // Predicated region
    $region9: #{tpu_custom_call.1} parent=5 // pred_check
      _
    $region10: #{tpu_custom_call.1} parent=5 // pred_check_branch
      %132 = sbr.rel (%p129) target = $region12
    $region11: #{tpu_custom_call.1} parent=5 // pred_region
      %s133 = ssub.s32 %s9, 1
      // Predicated region
      $region13: #{tpu_custom_call.1} parent=11 // pred_check
        %p134 = pneg %p70
      $region14: #{tpu_custom_call.1} parent=11 // pred_check_branch
        %136 = sbr.rel (%p134) target = $region16
      $region15: #{tpu_custom_call.1} parent=11 // pred_region
        _
      $region16: #{tpu_custom_call.1} parent=11 // pred_fallthru
        _
      // Predicated region
      $region17: #{tpu_custom_call.1} parent=11 // pred_check
        %p137 = pneg %p91
      $region18: #{tpu_custom_call.1} parent=11 // pred_check_branch
        %139 = sbr.rel (%p137) target = $region20
      $region19: #{tpu_custom_call.1} parent=11 // pred_region
        _
      $region20: #{tpu_custom_call.1} parent=11 // pred_fallthru
        _
    $region12: #{tpu_custom_call.1} parent=5 // pred_fallthru
      _
    %p140 = scmp.lt.s32.totalorder %s9, 2
    // Predicated region
    $region21: #{tpu_custom_call.1} parent=5 // pred_check
      %p141 = pneg %p140
    $region22: #{tpu_custom_call.1} parent=5 // pred_check_branch
      %143 = sbr.rel (%p141) target = $region24
    $region23: #{tpu_custom_call.1} parent=5 // pred_region
      // Predicated region
      $region25: #{tpu_custom_call.1} parent=23 // pred_check
        %p144 = pneg %p43
      $region26: #{tpu_custom_call.1} parent=23 // pred_check_branch
        %146 = sbr.rel (%p144) target = $region28
      $region27: #{tpu_custom_call.1} parent=23 // pred_region
        %p147 = scmp.lt.s32.totalorder %s16, 1
        %s148 = scalar_select %p147, %s16, 1
        %p149 = scmp.lt.s32.totalorder %s17, 0
        %s150 = scalar_select %p149, %s17, 0
        %s151 = smul.addr %s150, 54
        %s152 = smul.addr %s148, 54
        %s153 = sadd.s32 %s151, %s152
        %s154 = smul.addr %s153, 4
        %s155 = scalar_lea.vmem %s0, %s154
      $region28: #{tpu_custom_call.1} parent=23 // pred_fallthru
        _
    $region24: #{tpu_custom_call.1} parent=5 // pred_fallthru
      _
    %p156 = scmp.le.s32.totalorder 1, %s9
    %p157 = scmp.lt.s32.totalorder %s9, 3
    %p158 = pnand %p156, %p157
    %p159 = pneg %p158
    // Predicated region
    $region29: #{tpu_custom_call.1} parent=5 // pred_check
      _
    $region30: #{tpu_custom_call.1} parent=5 // pred_check_branch
      %161 = sbr.rel (%p158) target = $region32
    $region31: #{tpu_custom_call.1} parent=5 // pred_region
      %s162 = ssub.s32 %s9, 1
      %p163 = scmp.lt.s32.totalorder %s18, 1
      %s164 = scalar_select %p163, %s18, 1
      %p165 = scmp.lt.s32.totalorder %s19, 0
      %s166 = scalar_select %p165, %s19, 0
      %s167 = smul.addr %s166, 54
      %s168 = smul.addr %s164, 54
      %s169 = sadd.s32 %s167, %s168
      %s170 = smul.addr %s169, 4
      %s171 = scalar_lea.vmem %s0, %s170
      %p172 = pneg %p49
      %p173 = pneg %p46
      %p174 = pneg %p70
      %p175 = pneg %p67
      %p176 = pneg %p91
      %p177 = pneg %p88
      %p178 = pneg %p119
      %p179 = pneg %p116
      %p180 = scmp.lt.s32.totalorder %s18, 1
      %s181 = scalar_select %p180, %s18, 1
      %p182 = scmp.lt.s32.totalorder %s19, 0
      %s183 = scalar_select %p182, %s19, 0
      %s184 = smul.addr %s183, 32
      %s185 = smul.addr %s181, 32
      %s186 = sadd.s32 %s184, %s185
      %s187 = smul.addr %s186, 4
      %s188 = scalar_lea.vmem %s3, %s187
      %p189 = scmp.lt.s32.totalorder %s18, 1
      %s190 = scalar_select %p189, %s18, 1
      %p191 = scmp.lt.s32.totalorder %s19, 0
      %s192 = scalar_select %p191, %s19, 0
      %s193 = smul.addr %s192, 54
      %s194 = smul.addr %s190, 54
      %s195 = sadd.s32 %s193, %s194
      %s196 = smul.addr %s195, 4
      %s197 = scalar_lea.vmem %s0, %s196
      %p198 = scmp.lt.s32.totalorder %s18, 1
      %s199 = scalar_select %p198, %s18, 1
      %p200 = scmp.lt.s32.totalorder %s19, 0
      %s201 = scalar_select %p200, %s19, 0
      %s202 = smul.addr %s201, 32
      %s203 = smul.addr %s199, 32
      %s204 = sadd.s32 %s202, %s203
      %s205 = smul.addr %s204, 4
      %s206 = scalar_lea.vmem %s3, %s205
      %v208 = vld [vmem:[%s197] sm:$0xf]
      %v209 = vld [vmem:[%s197 + $0x4] sm:$0xf]
      %v210 = vld [vmem:[%s197 + $0x8] sm:$0x1]
      %v211 = vld [vmem:[%s197 + $0xc] sm:$0xf]
      %v212 = vld [vmem:[%s197 + $0x10] sm:$0xf]
      %v213 = vld [vmem:[%s197 + $0x14] sm:$0x1]
      %v214 = vld [vmem:[%s197 + $0x18] sm:$0xf]
      %v215 = vld [vmem:[%s197 + $0x1c] sm:$0xf]
      %v216 = vld [vmem:[%s197 + $0x20] sm:$0x1]
      %v217 = vld [vmem:[%s197 + $0x24] sm:$0xf]
      %v218 = vld [vmem:[%s197 + $0x28] sm:$0xf]
      %v219 = vld [vmem:[%s197 + $0x2c] sm:$0x1]
      %v220 = vld [vmem:[%s197 + $0x30] sm:$0xf]
      %v221 = vld [vmem:[%s197 + $0x34] sm:$0xf]
      %v222 = vld [vmem:[%s197 + $0x38] sm:$0x1]
      %v223 = vld [vmem:[%s197 + $0x3c] sm:$0xf]
      %v224 = vld [vmem:[%s197 + $0x40] sm:$0xf]
      %v225 = vld [vmem:[%s197 + $0x44] sm:$0x1]
      %v226 = vld [vmem:[%s197 + $0x48] sm:$0xf]
      %v227 = vld [vmem:[%s197 + $0x4c] sm:$0xf]
      %v228 = vld [vmem:[%s197 + $0x50] sm:$0x1]
      %v229 = vld [vmem:[%s197 + $0x54] sm:$0xf]
      %v230 = vld [vmem:[%s197 + $0x58] sm:$0xf]
      %v231 = vld [vmem:[%s197 + $0x5c] sm:$0x1]
      %v232 = vld [vmem:[%s197 + $0x60] sm:$0xf]
      %v233 = vld [vmem:[%s197 + $0x64] sm:$0xf]
      %v234 = vld [vmem:[%s197 + $0x68] sm:$0x1]
      %v235 = vld [vmem:[%s197 + $0x6c] sm:$0xf]
      %v236 = vld [vmem:[%s197 + $0x70] sm:$0xf]
      %v237 = vld [vmem:[%s197 + $0x74] sm:$0x1]
      %v238 = vld [vmem:[%s197 + $0x78] sm:$0xf]
      %v239 = vld [vmem:[%s197 + $0x7c] sm:$0xf]
      %v240 = vld [vmem:[%s197 + $0x80] sm:$0x1]
      %v241 = vld [vmem:[%s197 + $0x84] sm:$0xf]
      %v242 = vld [vmem:[%s197 + $0x88] sm:$0xf]
      %v243 = vld [vmem:[%s197 + $0x8c] sm:$0x1]
      %v244 = vld [vmem:[%s197 + $0x90] sm:$0xf]
      %v245 = vld [vmem:[%s197 + $0x94] sm:$0xf]
      %v246 = vld [vmem:[%s197 + $0x98] sm:$0x1]
      %v247 = vld [vmem:[%s197 + $0x9c] sm:$0xf]
      %v248 = vld [vmem:[%s197 + $0xa0] sm:$0xf]
      %v249 = vld [vmem:[%s197 + $0xa4] sm:$0x1]
      %v250 = vld [vmem:[%s197 + $0xa8] sm:$0xf]
      %v251 = vld [vmem:[%s197 + $0xac] sm:$0xf]
      %v252 = vld [vmem:[%s197 + $0xb0] sm:$0x1]
      %v253 = vld [vmem:[%s197 + $0xb4] sm:$0xf]
      %v254 = vld [vmem:[%s197 + $0xb8] sm:$0xf]
      %v255 = vld [vmem:[%s197 + $0xbc] sm:$0x1]
      %v256 = vld [vmem:[%s197 + $0xc0] sm:$0xf]
      %v257 = vld [vmem:[%s197 + $0xc4] sm:$0xf]
      %v258 = vld [vmem:[%s197 + $0xc8] sm:$0x1]
      %v259 = vld [vmem:[%s197 + $0xcc] sm:$0xf]
      %v260 = vld [vmem:[%s197 + $0xd0] sm:$0xf]
      %v261 = vld [vmem:[%s197 + $0xd4] sm:$0x1]
      %v262 = vld [vmem:[%s2] sm:$0x1]
      %v264 = vperm.slane %v262, 0
      %v266 = vld [vmem:[%s1] sm:$0x3]
      %v299 = vunpack.c.l.b16 %v208
      %v300 = vunpack.c.l.b16 %v209
      %v301 = vunpack.c.l.b16 %v211
      %v302 = vunpack.c.l.b16 %v212
      %v303 = vunpack.c.l.b16 %v214
      %v304 = vunpack.c.l.b16 %v215
      %v305 = vunpack.c.l.b16 %v217
      %v306 = vunpack.c.l.b16 %v218
      %v307 = vunpack.c.l.b16 %v220
      %v308 = vunpack.c.l.b16 %v221
      %v309 = vunpack.c.l.b16 %v223
      %v310 = vunpack.c.l.b16 %v224
      %v311 = vunpack.c.l.b16 %v226
      %v312 = vunpack.c.l.b16 %v227
      %v313 = vunpack.c.l.b16 %v229
      %v314 = vunpack.c.l.b16 %v230
      %v315 = vunpack.c.l.b16 %v232
      %v316 = vunpack.c.l.b16 %v233
      %v317 = vunpack.c.l.b16 %v235
      %v318 = vunpack.c.l.b16 %v236
      %v319 = vunpack.c.l.b16 %v238
      %v320 = vunpack.c.l.b16 %v239
      %v321 = vunpack.c.l.b16 %v241
      %v322 = vunpack.c.l.b16 %v242
      %v323 = vunpack.c.l.b16 %v244
      %v324 = vunpack.c.l.b16 %v245
      %v325 = vunpack.c.l.b16 %v247
      %v326 = vunpack.c.l.b16 %v248
      %v327 = vunpack.c.l.b16 %v250
      %v328 = vunpack.c.l.b16 %v251
      %v329 = vunpack.c.l.b16 %v253
      %v330 = vunpack.c.l.b16 %v254
      %v331 = vpack.c.b16 %v300, %v299
      %v332 = vpack.c.b16 %v302, %v301
      %v333 = vpack.c.b16 %v304, %v303
      %v334 = vpack.c.b16 %v306, %v305
      %v335 = vpack.c.b16 %v308, %v307
      %v336 = vpack.c.b16 %v310, %v309
      %v337 = vpack.c.b16 %v312, %v311
      %v338 = vpack.c.b16 %v314, %v313
      %v339 = vpack.c.b16 %v316, %v315
      %v340 = vpack.c.b16 %v318, %v317
      %v341 = vpack.c.b16 %v320, %v319
      %v342 = vpack.c.b16 %v322, %v321
      %v343 = vpack.c.b16 %v324, %v323
      %v344 = vpack.c.b16 %v326, %v325
      %v345 = vpack.c.b16 %v328, %v327
      %v346 = vpack.c.b16 %v330, %v329
      %vm347 = vcmask 31744
      %v349 = vsel %vm347, %v331, 0
      %v352 = vsel %vm347, %v332, 0
      %v355 = vsel %vm347, %v333, 0
      %v358 = vsel %vm347, %v334, 0
      %v361 = vsel %vm347, %v335, 0
      %v364 = vsel %vm347, %v336, 0
      %v367 = vsel %vm347, %v337, 0
      %v370 = vsel %vm347, %v338, 0
      %v373 = vsel %vm347, %v339, 0
      %v376 = vsel %vm347, %v340, 0
      %v379 = vsel %vm347, %v341, 0
      %v382 = vsel %vm347, %v342, 0
      %v385 = vsel %vm347, %v343, 0
      %v388 = vsel %vm347, %v344, 0
      %v391 = vsel %vm347, %v345, 0
      %v394 = vsel %vm347, %v346, 0
      %vm396 = vcmask 1041408
      %v398 = vsel %vm396, %v266, 0
      %400 = vmatpush.bf16.msra.mxu0 0
      %401 = vmatpush.bf16.msra.mxu0 0
      %402 = vmatpush.bf16.msra.mxu0 0
      %403 = vmatpush.bf16.msra.mxu0 0
      %404 = vmatpush.bf16.msra.mxu0 0
      %405 = vmatpush.bf16.msra.mxu0 0
      %406 = vmatpush.bf16.msra.mxu0 0
      %407 = vmatpush.bf16.msra.mxu0 %v398
      %408 = vmatmul.bf16.gmra.mxu0 %v349
      %v409 = vpop.f32.mrf.mxu0
      %v410 = vadd.f32 0.0, %v409
      %v411 = vpop.f32.mrf.mxu0
      %v412 = vadd.f32 0.0, %v411
      %413 = vmatmul.bf16.gmra.mxu0 %v352
      %v414 = vpop.f32.mrf.mxu0
      %v415 = vadd.f32 0.0, %v414
      %v416 = vpop.f32.mrf.mxu0
      %v417 = vadd.f32 0.0, %v416
      %418 = vmatmul.bf16.gmra.mxu0 %v355
      %v419 = vpop.f32.mrf.mxu0
      %v420 = vadd.f32 0.0, %v419
      %v421 = vpop.f32.mrf.mxu0
      %v422 = vadd.f32 0.0, %v421
      %423 = vmatmul.bf16.gmra.mxu0 %v358
      %v424 = vpop.f32.mrf.mxu0
      %v425 = vadd.f32 0.0, %v424
      %v426 = vpop.f32.mrf.mxu0
      %v427 = vadd.f32 0.0, %v426
      %428 = vmatmul.bf16.gmra.mxu0 %v361
      %v429 = vpop.f32.mrf.mxu0
      %v430 = vadd.f32 0.0, %v429
      %v431 = vpop.f32.mrf.mxu0
      %v432 = vadd.f32 0.0, %v431
      %433 = vmatmul.bf16.gmra.mxu0 %v364
      %v434 = vpop.f32.mrf.mxu0
      %v435 = vadd.f32 0.0, %v434
      %v436 = vpop.f32.mrf.mxu0
      %v437 = vadd.f32 0.0, %v436
      %438 = vmatmul.bf16.gmra.mxu0 %v367
      %v439 = vpop.f32.mrf.mxu0
      %v440 = vadd.f32 0.0, %v439
      %v441 = vpop.f32.mrf.mxu0
      %v442 = vadd.f32 0.0, %v441
      %443 = vmatmul.bf16.gmra.mxu0 %v370
      %v444 = vpop.f32.mrf.mxu0
      %v445 = vadd.f32 0.0, %v444
      %v446 = vpop.f32.mrf.mxu0
      %v447 = vadd.f32 0.0, %v446
      %448 = vmatmul.bf16.gmra.mxu0 %v373
      %v449 = vpop.f32.mrf.mxu0
      %v450 = vadd.f32 0.0, %v449
      %v451 = vpop.f32.mrf.mxu0
      %v452 = vadd.f32 0.0, %v451
      %453 = vmatmul.bf16.gmra.mxu0 %v376
      %v454 = vpop.f32.mrf.mxu0
      %v455 = vadd.f32 0.0, %v454
      %v456 = vpop.f32.mrf.mxu0
      %v457 = vadd.f32 0.0, %v456
      %458 = vmatmul.bf16.gmra.mxu0 %v379
      %v459 = vpop.f32.mrf.mxu0
      %v460 = vadd.f32 0.0, %v459
      %v461 = vpop.f32.mrf.mxu0
      %v462 = vadd.f32 0.0, %v461
      %463 = vmatmul.bf16.gmra.mxu0 %v382
      %v464 = vpop.f32.mrf.mxu0
      %v465 = vadd.f32 0.0, %v464
      %v466 = vpop.f32.mrf.mxu0
      %v467 = vadd.f32 0.0, %v466
      %468 = vmatmul.bf16.gmra.mxu0 %v385
      %v469 = vpop.f32.mrf.mxu0
      %v470 = vadd.f32 0.0, %v469
      %v471 = vpop.f32.mrf.mxu0
      %v472 = vadd.f32 0.0, %v471
      %473 = vmatmul.bf16.gmra.mxu0 %v388
      %v474 = vpop.f32.mrf.mxu0
      %v475 = vadd.f32 0.0, %v474
      %v476 = vpop.f32.mrf.mxu0
      %v477 = vadd.f32 0.0, %v476
      %478 = vmatmul.bf16.gmra.mxu0 %v391
      %v479 = vpop.f32.mrf.mxu0
      %v480 = vadd.f32 0.0, %v479
      %v481 = vpop.f32.mrf.mxu0
      %v482 = vadd.f32 0.0, %v481
      %483 = vmatmul.bf16.gmra.mxu0 %v394
      %v484 = vpop.f32.mrf.mxu0
      %v485 = vadd.f32 0.0, %v484
      %v486 = vpop.f32.mrf.mxu0
      %v487 = vadd.f32 0.0, %v486
      %488 = vdwg.mxu0
      %v489 = vadd.f32 %v264, %v410
      %v490 = vadd.f32 %v264, %v412
      %v491 = vadd.f32 %v264, %v415
      %v492 = vadd.f32 %v264, %v417
      %v493 = vadd.f32 %v264, %v420
      %v494 = vadd.f32 %v264, %v422
      %v495 = vadd.f32 %v264, %v425
      %v496 = vadd.f32 %v264, %v427
      %v497 = vadd.f32 %v264, %v430
      %v498 = vadd.f32 %v264, %v432
      %v499 = vadd.f32 %v264, %v435
      %v500 = vadd.f32 %v264, %v437
      %v501 = vadd.f32 %v264, %v440
      %v502 = vadd.f32 %v264, %v442
      %v503 = vadd.f32 %v264, %v445
      %v504 = vadd.f32 %v264, %v447
      %v505 = vadd.f32 %v264, %v450
      %v506 = vadd.f32 %v264, %v452
      %v507 = vadd.f32 %v264, %v455
      %v508 = vadd.f32 %v264, %v457
      %v509 = vadd.f32 %v264, %v460
      %v510 = vadd.f32 %v264, %v462
      %v511 = vadd.f32 %v264, %v465
      %v512 = vadd.f32 %v264, %v467
      %v513 = vadd.f32 %v264, %v470
      %v514 = vadd.f32 %v264, %v472
      %v515 = vadd.f32 %v264, %v475
      %v516 = vadd.f32 %v264, %v477
      %v517 = vadd.f32 %v264, %v480
      %v518 = vadd.f32 %v264, %v482
      %v519 = vadd.f32 %v264, %v485
      %v520 = vadd.f32 %v264, %v487
      %vm521 = vsmask.f32 3328
      %vm522 = vsmask.f32 7440
      %vm523 = vmor %vm521, %vm522
      %v525 = vshrl.u32 %v208, 16
      %v527 = vrot.slane %v525, 4
      %v528 = vshll.u32 %v208, 16
      %v530 = vrot.slane %v528, 5
      %v531 = vor.u32 %v527, %v530
      %v532 = vrot.slane %v531, 4
      %v534 = vshll.u32 %v209, 16
      %v536 = vrot.slane %v534, 5
      %v537 = vsel %vm523, %v532, %v536
      %v538 = vshrl.u32 %v209, 16
      %v540 = vrot.slane %v538, 4
      %v541 = vor.u32 %v540, %v536
      %v542 = vrot.slane %v541, 4
      %v544 = vshll.u32 %v210, 16
      %v546 = vrot.slane %v544, 5
      %v547 = vsel %vm523, %v542, %v546
      %v549 = vshrl.u32 %v211, 16
      %v551 = vrot.slane %v549, 4
      %v552 = vshll.u32 %v211, 16
      %v554 = vrot.slane %v552, 5
      %v555 = vor.u32 %v551, %v554
      %v556 = vrot.slane %v555, 4
      %v558 = vshll.u32 %v212, 16
      %v560 = vrot.slane %v558, 5
      %v561 = vsel %vm523, %v556, %v560
      %v562 = vshrl.u32 %v212, 16
      %v564 = vrot.slane %v562, 4
      %v565 = vor.u32 %v564, %v560
      %v566 = vrot.slane %v565, 4
      %v568 = vshll.u32 %v213, 16
      %v570 = vrot.slane %v568, 5
      %v571 = vsel %vm523, %v566, %v570
      %v573 = vshrl.u32 %v214, 16
      %v575 = vrot.slane %v573, 4
      %v576 = vshll.u32 %v214, 16
      %v578 = vrot.slane %v576, 5
      %v579 = vor.u32 %v575, %v578
      %v580 = vrot.slane %v579, 4
      %v582 = vshll.u32 %v215, 16
      %v584 = vrot.slane %v582, 5
      %v585 = vsel %vm523, %v580, %v584
      %v586 = vshrl.u32 %v215, 16
      %v588 = vrot.slane %v586, 4
      %v589 = vor.u32 %v588, %v584
      %v590 = vrot.slane %v589, 4
      %v592 = vshll.u32 %v216, 16
      %v594 = vrot.slane %v592, 5
      %v595 = vsel %vm523, %v590, %v594
      %v597 = vshrl.u32 %v217, 16
      %v599 = vrot.slane %v597, 4
      %v600 = vshll.u32 %v217, 16
      %v602 = vrot.slane %v600, 5
      %v603 = vor.u32 %v599, %v602
      %v604 = vrot.slane %v603, 4
      %v606 = vshll.u32 %v218, 16
      %v608 = vrot.slane %v606, 5
      %v609 = vsel %vm523, %v604, %v608
      %v610 = vshrl.u32 %v218, 16
      %v612 = vrot.slane %v610, 4
      %v613 = vor.u32 %v612, %v608
      %v614 = vrot.slane %v613, 4
      %v616 = vshll.u32 %v219, 16
      %v618 = vrot.slane %v616, 5
      %v619 = vsel %vm523, %v614, %v618
      %v621 = vshrl.u32 %v220, 16
      %v623 = vrot.slane %v621, 4
      %v624 = vshll.u32 %v220, 16
      %v626 = vrot.slane %v624, 5
      %v627 = vor.u32 %v623, %v626
      %v628 = vrot.slane %v627, 4
      %v630 = vshll.u32 %v221, 16
      %v632 = vrot.slane %v630, 5
      %v633 = vsel %vm523, %v628, %v632
      %v634 = vshrl.u32 %v221, 16
      %v636 = vrot.slane %v634, 4
      %v637 = vor.u32 %v636, %v632
      %v638 = vrot.slane %v637, 4
      %v640 = vshll.u32 %v222, 16
      %v642 = vrot.slane %v640, 5
      %v643 = vsel %vm523, %v638, %v642
      %v645 = vshrl.u32 %v223, 16
      %v647 = vrot.slane %v645, 4
      %v648 = vshll.u32 %v223, 16
      %v650 = vrot.slane %v648, 5
      %v651 = vor.u32 %v647, %v650
      %v652 = vrot.slane %v651, 4
      %v654 = vshll.u32 %v224, 16
      %v656 = vrot.slane %v654, 5
      %v657 = vsel %vm523, %v652, %v656
      %v658 = vshrl.u32 %v224, 16
      %v660 = vrot.slane %v658, 4
      %v661 = vor.u32 %v660, %v656
      %v662 = vrot.slane %v661, 4
      %v664 = vshll.u32 %v225, 16
      %v666 = vrot.slane %v664, 5
      %v667 = vsel %vm523, %v662, %v666
      %v669 = vshrl.u32 %v226, 16
      %v671 = vrot.slane %v669, 4
      %v672 = vshll.u32 %v226, 16
      %v674 = vrot.slane %v672, 5
      %v675 = vor.u32 %v671, %v674
      %v676 = vrot.slane %v675, 4
      %v678 = vshll.u32 %v227, 16
      %v680 = vrot.slane %v678, 5
      %v681 = vsel %vm523, %v676, %v680
      %v682 = vshrl.u32 %v227, 16
      %v684 = vrot.slane %v682, 4
      %v685 = vor.u32 %v684, %v680
      %v686 = vrot.slane %v685, 4
      %v688 = vshll.u32 %v228, 16
      %v690 = vrot.slane %v688, 5
      %v691 = vsel %vm523, %v686, %v690
      %v693 = vshrl.u32 %v229, 16
      %v695 = vrot.slane %v693, 4
      %v696 = vshll.u32 %v229, 16
      %v698 = vrot.slane %v696, 5
      %v699 = vor.u32 %v695, %v698
      %v700 = vrot.slane %v699, 4
      %v702 = vshll.u32 %v230, 16
      %v704 = vrot.slane %v702, 5
      %v705 = vsel %vm523, %v700, %v704
      %v706 = vshrl.u32 %v230, 16
      %v708 = vrot.slane %v706, 4
      %v709 = vor.u32 %v708, %v704
      %v710 = vrot.slane %v709, 4
      %v712 = vshll.u32 %v231, 16
      %v714 = vrot.slane %v712, 5
      %v715 = vsel %vm523, %v710, %v714
      %v717 = vshrl.u32 %v232, 16
      %v719 = vrot.slane %v717, 4
      %v720 = vshll.u32 %v232, 16
      %v722 = vrot.slane %v720, 5
      %v723 = vor.u32 %v719, %v722
      %v724 = vrot.slane %v723, 4
      %v726 = vshll.u32 %v233, 16
      %v728 = vrot.slane %v726, 5
      %v729 = vsel %vm523, %v724, %v728
      %v730 = vshrl.u32 %v233, 16
      %v732 = vrot.slane %v730, 4
      %v733 = vor.u32 %v732, %v728
      %v734 = vrot.slane %v733, 4
      %v736 = vshll.u32 %v234, 16
      %v738 = vrot.slane %v736, 5
      %v739 = vsel %vm523, %v734, %v738
      %v741 = vshrl.u32 %v235, 16
      %v743 = vrot.slane %v741, 4
      %v744 = vshll.u32 %v235, 16
      %v746 = vrot.slane %v744, 5
      %v747 = vor.u32 %v743, %v746
      %v748 = vrot.slane %v747, 4
      %v750 = vshll.u32 %v236, 16
      %v752 = vrot.slane %v750, 5
      %v753 = vsel %vm523, %v748, %v752
      %v754 = vshrl.u32 %v236, 16
      %v756 = vrot.slane %v754, 4
      %v757 = vor.u32 %v756, %v752
      %v758 = vrot.slane %v757, 4
      %v760 = vshll.u32 %v237, 16
      %v762 = vrot.slane %v760, 5
      %v763 = vsel %vm523, %v758, %v762
      %v765 = vshrl.u32 %v238, 16
      %v767 = vrot.slane %v765, 4
      %v768 = vshll.u32 %v238, 16
      %v770 = vrot.slane %v768, 5
      %v771 = vor.u32 %v767, %v770
      %v772 = vrot.slane %v771, 4
      %v774 = vshll.u32 %v239, 16
      %v776 = vrot.slane %v774, 5
      %v777 = vsel %vm523, %v772, %v776
      %v778 = vshrl.u32 %v239, 16
      %v780 = vrot.slane %v778, 4
      %v781 = vor.u32 %v780, %v776
      %v782 = vrot.slane %v781, 4
      %v784 = vshll.u32 %v240, 16
      %v786 = vrot.slane %v784, 5
      %v787 = vsel %vm523, %v782, %v786
      %v789 = vshrl.u32 %v241, 16
      %v791 = vrot.slane %v789, 4
      %v792 = vshll.u32 %v241, 16
      %v794 = vrot.slane %v792, 5
      %v795 = vor.u32 %v791, %v794
      %v796 = vrot.slane %v795, 4
      %v798 = vshll.u32 %v242, 16
      %v800 = vrot.slane %v798, 5
      %v801 = vsel %vm523, %v796, %v800
      %v802 = vshrl.u32 %v242, 16
      %v804 = vrot.slane %v802, 4
      %v805 = vor.u32 %v804, %v800
      %v806 = vrot.slane %v805, 4
      %v808 = vshll.u32 %v243, 16
      %v810 = vrot.slane %v808, 5
      %v811 = vsel %vm523, %v806, %v810
      %v813 = vshrl.u32 %v244, 16
      %v815 = vrot.slane %v813, 4
      %v816 = vshll.u32 %v244, 16
      %v818 = vrot.slane %v816, 5
      %v819 = vor.u32 %v815, %v818
      %v820 = vrot.slane %v819, 4
      %v822 = vshll.u32 %v245, 16
      %v824 = vrot.slane %v822, 5
      %v825 = vsel %vm523, %v820, %v824
      %v826 = vshrl.u32 %v245, 16
      %v828 = vrot.slane %v826, 4
      %v829 = vor.u32 %v828, %v824
      %v830 = vrot.slane %v829, 4
      %v832 = vshll.u32 %v246, 16
      %v834 = vrot.slane %v832, 5
      %v835 = vsel %vm523, %v830, %v834
      %v837 = vshrl.u32 %v247, 16
      %v839 = vrot.slane %v837, 4
      %v840 = vshll.u32 %v247, 16
      %v842 = vrot.slane %v840, 5
      %v843 = vor.u32 %v839, %v842
      %v844 = vrot.slane %v843, 4
      %v846 = vshll.u32 %v248, 16
      %v848 = vrot.slane %v846, 5
      %v849 = vsel %vm523, %v844, %v848
      %v850 = vshrl.u32 %v248, 16
      %v852 = vrot.slane %v850, 4
      %v853 = vor.u32 %v852, %v848
      %v854 = vrot.slane %v853, 4
      %v856 = vshll.u32 %v249, 16
      %v858 = vrot.slane %v856, 5
      %v859 = vsel %vm523, %v854, %v858
      %v861 = vshrl.u32 %v250, 16
      %v863 = vrot.slane %v861, 4
      %v864 = vshll.u32 %v250, 16
      %v866 = vrot.slane %v864, 5
      %v867 = vor.u32 %v863, %v866
      %v868 = vrot.slane %v867, 4
      %v870 = vshll.u32 %v251, 16
      %v872 = vrot.slane %v870, 5
      %v873 = vsel %vm523, %v868, %v872
      %v874 = vshrl.u32 %v251, 16
      %v876 = vrot.slane %v874, 4
      %v877 = vor.u32 %v876, %v872
      %v878 = vrot.slane %v877, 4
      %v880 = vshll.u32 %v252, 16
      %v882 = vrot.slane %v880, 5
      %v883 = vsel %vm523, %v878, %v882
      %v885 = vshrl.u32 %v253, 16
      %v887 = vrot.slane %v885, 4
      %v888 = vshll.u32 %v253, 16
      %v890 = vrot.slane %v888, 5
      %v891 = vor.u32 %v887, %v890
      %v892 = vrot.slane %v891, 4
      %v894 = vshll.u32 %v254, 16
      %v896 = vrot.slane %v894, 5
      %v897 = vsel %vm523, %v892, %v896
      %v898 = vshrl.u32 %v254, 16
      %v900 = vrot.slane %v898, 4
      %v901 = vor.u32 %v900, %v896
      %v902 = vrot.slane %v901, 4
      %v904 = vshll.u32 %v255, 16
      %v906 = vrot.slane %v904, 5
      %v907 = vsel %vm523, %v902, %v906
      %s908 = scalar_lea.vmem %s1, 2
      %v909 = vld [vmem:[%s908] sm:$0x3]
      %v910 = vunpack.c.l.b16 %v537
      %v911 = vunpack.c.l.b16 %v547
      %v912 = vunpack.c.l.b16 %v561
      %v913 = vunpack.c.l.b16 %v571
      %v914 = vunpack.c.l.b16 %v585
      %v915 = vunpack.c.l.b16 %v595
      %v916 = vunpack.c.l.b16 %v609
      %v917 = vunpack.c.l.b16 %v619
      %v918 = vunpack.c.l.b16 %v633
      %v919 = vunpack.c.l.b16 %v643
      %v920 = vunpack.c.l.b16 %v657
      %v921 = vunpack.c.l.b16 %v667
      %v922 = vunpack.c.l.b16 %v681
      %v923 = vunpack.c.l.b16 %v691
      %v924 = vunpack.c.l.b16 %v705
      %v925 = vunpack.c.l.b16 %v715
      %v926 = vunpack.c.l.b16 %v729
      %v927 = vunpack.c.l.b16 %v739
      %v928 = vunpack.c.l.b16 %v753
      %v929 = vunpack.c.l.b16 %v763
      %v930 = vunpack.c.l.b16 %v777
      %v931 = vunpack.c.l.b16 %v787
      %v932 = vunpack.c.l.b16 %v801
      %v933 = vunpack.c.l.b16 %v811
      %v934 = vunpack.c.l.b16 %v825
      %v935 = vunpack.c.l.b16 %v835
      %v936 = vunpack.c.l.b16 %v849
      %v937 = vunpack.c.l.b16 %v859
      %v938 = vunpack.c.l.b16 %v873
      %v939 = vunpack.c.l.b16 %v883
      %v940 = vunpack.c.l.b16 %v897
      %v941 = vunpack.c.l.b16 %v907
      %v942 = vpack.c.b16 %v911, %v910
      %v943 = vpack.c.b16 %v913, %v912
      %v944 = vpack.c.b16 %v915, %v914
      %v945 = vpack.c.b16 %v917, %v916
      %v946 = vpack.c.b16 %v919, %v918
      %v947 = vpack.c.b16 %v921, %v920
      %v948 = vpack.c.b16 %v923, %v922
      %v949 = vpack.c.b16 %v925, %v924
      %v950 = vpack.c.b16 %v927, %v926
      %v951 = vpack.c.b16 %v929, %v928
      %v952 = vpack.c.b16 %v931, %v930
      %v953 = vpack.c.b16 %v933, %v932
      %v954 = vpack.c.b16 %v935, %v934
      %v955 = vpack.c.b16 %v937, %v936
      %v956 = vpack.c.b16 %v939, %v938
      %v957 = vpack.c.b16 %v941, %v940
      %v959 = vsel %vm347, %v942, 0
      %v962 = vsel %vm347, %v943, 0
      %v965 = vsel %vm347, %v944, 0
      %v968 = vsel %vm347, %v945, 0
      %v971 = vsel %vm347, %v946, 0
      %v974 = vsel %vm347, %v947, 0
      %v977 = vsel %vm347, %v948, 0
      %v980 = vsel %vm347, %v949, 0
      %v983 = vsel %vm347, %v950, 0
      %v986 = vsel %vm347, %v951, 0
      %v989 = vsel %vm347, %v952, 0
      %v992 = vsel %vm347, %v953, 0
      %v995 = vsel %vm347, %v954, 0
      %v998 = vsel %vm347, %v955, 0
      %v1001 = vsel %vm347, %v956, 0
      %v1004 = vsel %vm347, %v957, 0
      %v1007 = vsel %vm396, %v909, 0
      %1009 = vmatpush.bf16.msra.mxu0 0
      %1010 = vmatpush.bf16.msra.mxu0 0
      %1011 = vmatpush.bf16.msra.mxu0 0
      %1012 = vmatpush.bf16.msra.mxu0 0
      %1013 = vmatpush.bf16.msra.mxu0 0
      %1014 = vmatpush.bf16.msra.mxu0 0
      %1015 = vmatpush.bf16.msra.mxu0 0
      %1016 = vmatpush.bf16.msra.mxu0 %v1007
      %1017 = vmatmul.bf16.gmra.mxu0 %v959
      %v1018 = vpop.f32.mrf.mxu0
      %v1019 = vadd.f32 0.0, %v1018
      %v1020 = vpop.f32.mrf.mxu0
      %v1021 = vadd.f32 0.0, %v1020
      %1022 = vmatmul.bf16.gmra.mxu0 %v962
      %v1023 = vpop.f32.mrf.mxu0
      %v1024 = vadd.f32 0.0, %v1023
      %v1025 = vpop.f32.mrf.mxu0
      %v1026 = vadd.f32 0.0, %v1025
      %1027 = vmatmul.bf16.gmra.mxu0 %v965
      %v1028 = vpop.f32.mrf.mxu0
      %v1029 = vadd.f32 0.0, %v1028
      %v1030 = vpop.f32.mrf.mxu0
      %v1031 = vadd.f32 0.0, %v1030
      %1032 = vmatmul.bf16.gmra.mxu0 %v968
      %v1033 = vpop.f32.mrf.mxu0
      %v1034 = vadd.f32 0.0, %v1033
      %v1035 = vpop.f32.mrf.mxu0
      %v1036 = vadd.f32 0.0, %v1035
      %1037 = vmatmul.bf16.gmra.mxu0 %v971
      %v1038 = vpop.f32.mrf.mxu0
      %v1039 = vadd.f32 0.0, %v1038
      %v1040 = vpop.f32.mrf.mxu0
      %v1041 = vadd.f32 0.0, %v1040
      %1042 = vmatmul.bf16.gmra.mxu0 %v974
      %v1043 = vpop.f32.mrf.mxu0
      %v1044 = vadd.f32 0.0, %v1043
      %v1045 = vpop.f32.mrf.mxu0
      %v1046 = vadd.f32 0.0, %v1045
      %1047 = vmatmul.bf16.gmra.mxu0 %v977
      %v1048 = vpop.f32.mrf.mxu0
      %v1049 = vadd.f32 0.0, %v1048
      %v1050 = vpop.f32.mrf.mxu0
      %v1051 = vadd.f32 0.0, %v1050
      %1052 = vmatmul.bf16.gmra.mxu0 %v980
      %v1053 = vpop.f32.mrf.mxu0
      %v1054 = vadd.f32 0.0, %v1053
      %v1055 = vpop.f32.mrf.mxu0
      %v1056 = vadd.f32 0.0, %v1055
      %1057 = vmatmul.bf16.gmra.mxu0 %v983
      %v1058 = vpop.f32.mrf.mxu0
      %v1059 = vadd.f32 0.0, %v1058
      %v1060 = vpop.f32.mrf.mxu0
      %v1061 = vadd.f32 0.0, %v1060
      %1062 = vmatmul.bf16.gmra.mxu0 %v986
      %v1063 = vpop.f32.mrf.mxu0
      %v1064 = vadd.f32 0.0, %v1063
      %v1065 = vpop.f32.mrf.mxu0
      %v1066 = vadd.f32 0.0, %v1065
      %1067 = vmatmul.bf16.gmra.mxu0 %v989
      %v1068 = vpop.f32.mrf.mxu0
      %v1069 = vadd.f32 0.0, %v1068
      %v1070 = vpop.f32.mrf.mxu0
      %v1071 = vadd.f32 0.0, %v1070
      %1072 = vmatmul.bf16.gmra.mxu0 %v992
      %v1073 = vpop.f32.mrf.mxu0
      %v1074 = vadd.f32 0.0, %v1073
      %v1075 = vpop.f32.mrf.mxu0
      %v1076 = vadd.f32 0.0, %v1075
      %1077 = vmatmul.bf16.gmra.mxu0 %v995
      %v1078 = vpop.f32.mrf.mxu0
      %v1079 = vadd.f32 0.0, %v1078
      %v1080 = vpop.f32.mrf.mxu0
      %v1081 = vadd.f32 0.0, %v1080
      %1082 = vmatmul.bf16.gmra.mxu0 %v998
      %v1083 = vpop.f32.mrf.mxu0
      %v1084 = vadd.f32 0.0, %v1083
      %v1085 = vpop.f32.mrf.mxu0
      %v1086 = vadd.f32 0.0, %v1085
      %1087 = vmatmul.bf16.gmra.mxu0 %v1001
      %v1088 = vpop.f32.mrf.mxu0
      %v1089 = vadd.f32 0.0, %v1088
      %v1090 = vpop.f32.mrf.mxu0
      %v1091 = vadd.f32 0.0, %v1090
      %1092 = vmatmul.bf16.gmra.mxu0 %v1004
      %v1093 = vpop.f32.mrf.mxu0
      %v1094 = vadd.f32 0.0, %v1093
      %v1095 = vpop.f32.mrf.mxu0
      %v1096 = vadd.f32 0.0, %v1095
      %1097 = vdwg.mxu0
      %v1098 = vadd.f32 %v489, %v1019
      %v1099 = vadd.f32 %v490, %v1021
      %v1100 = vadd.f32 %v491, %v1024
      %v1101 = vadd.f32 %v492, %v1026
      %v1102 = vadd.f32 %v493, %v1029
      %v1103 = vadd.f32 %v494, %v1031
      %v1104 = vadd.f32 %v495, %v1034
      %v1105 = vadd.f32 %v496, %v1036
      %v1106 = vadd.f32 %v497, %v1039
      %v1107 = vadd.f32 %v498, %v1041
      %v1108 = vadd.f32 %v499, %v1044
      %v1109 = vadd.f32 %v500, %v1046
      %v1110 = vadd.f32 %v501, %v1049
      %v1111 = vadd.f32 %v502, %v1051
      %v1112 = vadd.f32 %v503, %v1054
      %v1113 = vadd.f32 %v504, %v1056
      %v1114 = vadd.f32 %v505, %v1059
      %v1115 = vadd.f32 %v506, %v1061
      %v1116 = vadd.f32 %v507, %v1064
      %v1117 = vadd.f32 %v508, %v1066
      %v1118 = vadd.f32 %v509, %v1069
      %v1119 = vadd.f32 %v510, %v1071
      %v1120 = vadd.f32 %v511, %v1074
      %v1121 = vadd.f32 %v512, %v1076
      %v1122 = vadd.f32 %v513, %v1079
      %v1123 = vadd.f32 %v514, %v1081
      %v1124 = vadd.f32 %v515, %v1084
      %v1125 = vadd.f32 %v516, %v1086
      %v1126 = vadd.f32 %v517, %v1089
      %v1127 = vadd.f32 %v518, %v1091
      %v1128 = vadd.f32 %v519, %v1094
      %v1129 = vadd.f32 %v520, %v1096
      %vm1146 = vcmask 1042432
      %vm1147 = vcmask 1046532
      %vm1148 = vmor %vm1146, %vm1147
      %v1149 = vrot.slane %v208, 5
      %v1150 = vrot.slane %v1149, 4
      %v1151 = vrot.slane %v209, 5
      %v1152 = vsel %vm1148, %v1150, %v1151
      %v1153 = vrot.slane %v1151, 4
      %v1154 = vrot.slane %v210, 5
      %v1155 = vsel %vm1148, %v1153, %v1154
      %v1156 = vrot.slane %v211, 5
      %v1157 = vrot.slane %v1156, 4
      %v1158 = vrot.slane %v212, 5
      %v1159 = vsel %vm1148, %v1157, %v1158
      %v1160 = vrot.slane %v1158, 4
      %v1161 = vrot.slane %v213, 5
      %v1162 = vsel %vm1148, %v1160, %v1161
      %v1163 = vrot.slane %v214, 5
      %v1164 = vrot.slane %v1163, 4
      %v1165 = vrot.slane %v215, 5
      %v1166 = vsel %vm1148, %v1164, %v1165
      %v1167 = vrot.slane %v1165, 4
      %v1168 = vrot.slane %v216, 5
      %v1169 = vsel %vm1148, %v1167, %v1168
      %v1170 = vrot.slane %v217, 5
      %v1171 = vrot.slane %v1170, 4
      %v1172 = vrot.slane %v218, 5
      %v1173 = vsel %vm1148, %v1171, %v1172
      %v1174 = vrot.slane %v1172, 4
      %v1175 = vrot.slane %v219, 5
      %v1176 = vsel %vm1148, %v1174, %v1175
      %v1177 = vrot.slane %v220, 5
      %v1178 = vrot.slane %v1177, 4
      %v1179 = vrot.slane %v221, 5
      %v1180 = vsel %vm1148, %v1178, %v1179
      %v1181 = vrot.slane %v1179, 4
      %v1182 = vrot.slane %v222, 5
      %v1183 = vsel %vm1148, %v1181, %v1182
      %v1184 = vrot.slane %v223, 5
      %v1185 = vrot.slane %v1184, 4
      %v1186 = vrot.slane %v224, 5
      %v1187 = vsel %vm1148, %v1185, %v1186
      %v1188 = vrot.slane %v1186, 4
      %v1189 = vrot.slane %v225, 5
      %v1190 = vsel %vm1148, %v1188, %v1189
      %v1191 = vrot.slane %v226, 5
      %v1192 = vrot.slane %v1191, 4
      %v1193 = vrot.slane %v227, 5
      %v1194 = vsel %vm1148, %v1192, %v1193
      %v1195 = vrot.slane %v1193, 4
      %v1196 = vrot.slane %v228, 5
      %v1197 = vsel %vm1148, %v1195, %v1196
      %v1198 = vrot.slane %v229, 5
      %v1199 = vrot.slane %v1198, 4
      %v1200 = vrot.slane %v230, 5
      %v1201 = vsel %vm1148, %v1199, %v1200
      %v1202 = vrot.slane %v1200, 4
      %v1203 = vrot.slane %v231, 5
      %v1204 = vsel %vm1148, %v1202, %v1203
      %v1205 = vrot.slane %v232, 5
      %v1206 = vrot.slane %v1205, 4
      %v1207 = vrot.slane %v233, 5
      %v1208 = vsel %vm1148, %v1206, %v1207
      %v1209 = vrot.slane %v1207, 4
      %v1210 = vrot.slane %v234, 5
      %v1211 = vsel %vm1148, %v1209, %v1210
      %v1212 = vrot.slane %v235, 5
      %v1213 = vrot.slane %v1212, 4
      %v1214 = vrot.slane %v236, 5
      %v1215 = vsel %vm1148, %v1213, %v1214
      %v1216 = vrot.slane %v1214, 4
      %v1217 = vrot.slane %v237, 5
      %v1218 = vsel %vm1148, %v1216, %v1217
      %v1219 = vrot.slane %v238, 5
      %v1220 = vrot.slane %v1219, 4
      %v1221 = vrot.slane %v239, 5
      %v1222 = vsel %vm1148, %v1220, %v1221
      %v1223 = vrot.slane %v1221, 4
      %v1224 = vrot.slane %v240, 5
      %v1225 = vsel %vm1148, %v1223, %v1224
      %v1226 = vrot.slane %v241, 5
      %v1227 = vrot.slane %v1226, 4
      %v1228 = vrot.slane %v242, 5
      %v1229 = vsel %vm1148, %v1227, %v1228
      %v1230 = vrot.slane %v1228, 4
      %v1231 = vrot.slane %v243, 5
      %v1232 = vsel %vm1148, %v1230, %v1231
      %v1233 = vrot.slane %v244, 5
      %v1234 = vrot.slane %v1233, 4
      %v1235 = vrot.slane %v245, 5
      %v1236 = vsel %vm1148, %v1234, %v1235
      %v1237 = vrot.slane %v1235, 4
      %v1238 = vrot.slane %v246, 5
      %v1239 = vsel %vm1148, %v1237, %v1238
      %v1240 = vrot.slane %v247, 5
      %v1241 = vrot.slane %v1240, 4
      %v1242 = vrot.slane %v248, 5
      %v1243 = vsel %vm1148, %v1241, %v1242
      %v1244 = vrot.slane %v1242, 4
      %v1245 = vrot.slane %v249, 5
      %v1246 = vsel %vm1148, %v1244, %v1245
      %v1247 = vrot.slane %v250, 5
      %v1248 = vrot.slane %v1247, 4
      %v1249 = vrot.slane %v251, 5
      %v1250 = vsel %vm1148, %v1248, %v1249
      %v1251 = vrot.slane %v1249, 4
      %v1252 = vrot.slane %v252, 5
      %v1253 = vsel %vm1148, %v1251, %v1252
      %v1254 = vrot.slane %v253, 5
      %v1255 = vrot.slane %v1254, 4
      %v1256 = vrot.slane %v254, 5
      %v1257 = vsel %vm1148, %v1255, %v1256
      %v1258 = vrot.slane %v1256, 4
      %v1259 = vrot.slane %v255, 5
      %v1260 = vsel %vm1148, %v1258, %v1259
      %s1261 = scalar_lea.vmem %s1, 4
      %v1262 = vld [vmem:[%s1261] sm:$0x3]
      %v1263 = vunpack.c.l.b16 %v1152
      %v1264 = vunpack.c.l.b16 %v1155
      %v1265 = vunpack.c.l.b16 %v1159
      %v1266 = vunpack.c.l.b16 %v1162
      %v1267 = vunpack.c.l.b16 %v1166
      %v1268 = vunpack.c.l.b16 %v1169
      %v1269 = vunpack.c.l.b16 %v1173
      %v1270 = vunpack.c.l.b16 %v1176
      %v1271 = vunpack.c.l.b16 %v1180
      %v1272 = vunpack.c.l.b16 %v1183
      %v1273 = vunpack.c.l.b16 %v1187
      %v1274 = vunpack.c.l.b16 %v1190
      %v1275 = vunpack.c.l.b16 %v1194
      %v1276 = vunpack.c.l.b16 %v1197
      %v1277 = vunpack.c.l.b16 %v1201
      %v1278 = vunpack.c.l.b16 %v1204
      %v1279 = vunpack.c.l.b16 %v1208
      %v1280 = vunpack.c.l.b16 %v1211
      %v1281 = vunpack.c.l.b16 %v1215
      %v1282 = vunpack.c.l.b16 %v1218
      %v1283 = vunpack.c.l.b16 %v1222
      %v1284 = vunpack.c.l.b16 %v1225
      %v1285 = vunpack.c.l.b16 %v1229
      %v1286 = vunpack.c.l.b16 %v1232
      %v1287 = vunpack.c.l.b16 %v1236
      %v1288 = vunpack.c.l.b16 %v1239
      %v1289 = vunpack.c.l.b16 %v1243
      %v1290 = vunpack.c.l.b16 %v1246
      %v1291 = vunpack.c.l.b16 %v1250
      %v1292 = vunpack.c.l.b16 %v1253
      %v1293 = vunpack.c.l.b16 %v1257
      %v1294 = vunpack.c.l.b16 %v1260
      %v1295 = vpack.c.b16 %v1264, %v1263
      %v1296 = vpack.c.b16 %v1266, %v1265
      %v1297 = vpack.c.b16 %v1268, %v1267
      %v1298 = vpack.c.b16 %v1270, %v1269
      %v1299 = vpack.c.b16 %v1272, %v1271
      %v1300 = vpack.c.b16 %v1274, %v1273
      %v1301 = vpack.c.b16 %v1276, %v1275
      %v1302 = vpack.c.b16 %v1278, %v1277
      %v1303 = vpack.c.b16 %v1280, %v1279
      %v1304 = vpack.c.b16 %v1282, %v1281
      %v1305 = vpack.c.b16 %v1284, %v1283
      %v1306 = vpack.c.b16 %v1286, %v1285
      %v1307 = vpack.c.b16 %v1288, %v1287
      %v1308 = vpack.c.b16 %v1290, %v1289
      %v1309 = vpack.c.b16 %v1292, %v1291
      %v1310 = vpack.c.b16 %v1294, %v1293
      %v1312 = vsel %vm347, %v1295, 0
      %v1315 = vsel %vm347, %v1296, 0
      %v1318 = vsel %vm347, %v1297, 0
      %v1321 = vsel %vm347, %v1298, 0
      %v1324 = vsel %vm347, %v1299, 0
      %v1327 = vsel %vm347, %v1300, 0
      %v1330 = vsel %vm347, %v1301, 0
      %v1333 = vsel %vm347, %v1302, 0
      %v1336 = vsel %vm347, %v1303, 0
      %v1339 = vsel %vm347, %v1304, 0
      %v1342 = vsel %vm347, %v1305, 0
      %v1345 = vsel %vm347, %v1306, 0
      %v1348 = vsel %vm347, %v1307, 0
      %v1351 = vsel %vm347, %v1308, 0
      %v1354 = vsel %vm347, %v1309, 0
      %v1357 = vsel %vm347, %v1310, 0
      %v1360 = vsel %vm396, %v1262, 0
      %1362 = vmatpush.bf16.msra.mxu0 0
      %1363 = vmatpush.bf16.msra.mxu0 0
      %1364 = vmatpush.bf16.msra.mxu0 0
      %1365 = vmatpush.bf16.msra.mxu0 0
      %1366 = vmatpush.bf16.msra.mxu0 0
      %1367 = vmatpush.bf16.msra.mxu0 0
      %1368 = vmatpush.bf16.msra.mxu0 0
      %1369 = vmatpush.bf16.msra.mxu0 %v1360
      %1370 = vmatmul.bf16.gmra.mxu0 %v1312
      %v1371 = vpop.f32.mrf.mxu0
      %v1372 = vadd.f32 0.0, %v1371
      %v1373 = vpop.f32.mrf.mxu0
      %v1374 = vadd.f32 0.0, %v1373
      %1375 = vmatmul.bf16.gmra.mxu0 %v1315
      %v1376 = vpop.f32.mrf.mxu0
      %v1377 = vadd.f32 0.0, %v1376
      %v1378 = vpop.f32.mrf.mxu0
      %v1379 = vadd.f32 0.0, %v1378
      %1380 = vmatmul.bf16.gmra.mxu0 %v1318
      %v1381 = vpop.f32.mrf.mxu0
      %v1382 = vadd.f32 0.0, %v1381
      %v1383 = vpop.f32.mrf.mxu0
      %v1384 = vadd.f32 0.0, %v1383
      %1385 = vmatmul.bf16.gmra.mxu0 %v1321
      %v1386 = vpop.f32.mrf.mxu0
      %v1387 = vadd.f32 0.0, %v1386
      %v1388 = vpop.f32.mrf.mxu0
      %v1389 = vadd.f32 0.0, %v1388
      %1390 = vmatmul.bf16.gmra.mxu0 %v1324
      %v1391 = vpop.f32.mrf.mxu0
      %v1392 = vadd.f32 0.0, %v1391
      %v1393 = vpop.f32.mrf.mxu0
      %v1394 = vadd.f32 0.0, %v1393
      %1395 = vmatmul.bf16.gmra.mxu0 %v1327
      %v1396 = vpop.f32.mrf.mxu0
      %v1397 = vadd.f32 0.0, %v1396
      %v1398 = vpop.f32.mrf.mxu0
      %v1399 = vadd.f32 0.0, %v1398
      %1400 = vmatmul.bf16.gmra.mxu0 %v1330
      %v1401 = vpop.f32.mrf.mxu0
      %v1402 = vadd.f32 0.0, %v1401
      %v1403 = vpop.f32.mrf.mxu0
      %v1404 = vadd.f32 0.0, %v1403
      %1405 = vmatmul.bf16.gmra.mxu0 %v1333
      %v1406 = vpop.f32.mrf.mxu0
      %v1407 = vadd.f32 0.0, %v1406
      %v1408 = vpop.f32.mrf.mxu0
      %v1409 = vadd.f32 0.0, %v1408
      %1410 = vmatmul.bf16.gmra.mxu0 %v1336
      %v1411 = vpop.f32.mrf.mxu0
      %v1412 = vadd.f32 0.0, %v1411
      %v1413 = vpop.f32.mrf.mxu0
      %v1414 = vadd.f32 0.0, %v1413
      %1415 = vmatmul.bf16.gmra.mxu0 %v1339
      %v1416 = vpop.f32.mrf.mxu0
      %v1417 = vadd.f32 0.0, %v1416
      %v1418 = vpop.f32.mrf.mxu0
      %v1419 = vadd.f32 0.0, %v1418
      %1420 = vmatmul.bf16.gmra.mxu0 %v1342
      %v1421 = vpop.f32.mrf.mxu0
      %v1422 = vadd.f32 0.0, %v1421
      %v1423 = vpop.f32.mrf.mxu0
      %v1424 = vadd.f32 0.0, %v1423
      %1425 = vmatmul.bf16.gmra.mxu0 %v1345
      %v1426 = vpop.f32.mrf.mxu0
      %v1427 = vadd.f32 0.0, %v1426
      %v1428 = vpop.f32.mrf.mxu0
      %v1429 = vadd.f32 0.0, %v1428
      %1430 = vmatmul.bf16.gmra.mxu0 %v1348
      %v1431 = vpop.f32.mrf.mxu0
      %v1432 = vadd.f32 0.0, %v1431
      %v1433 = vpop.f32.mrf.mxu0
      %v1434 = vadd.f32 0.0, %v1433
      %1435 = vmatmul.bf16.gmra.mxu0 %v1351
      %v1436 = vpop.f32.mrf.mxu0
      %v1437 = vadd.f32 0.0, %v1436
      %v1438 = vpop.f32.mrf.mxu0
      %v1439 = vadd.f32 0.0, %v1438
      %1440 = vmatmul.bf16.gmra.mxu0 %v1354
      %v1441 = vpop.f32.mrf.mxu0
      %v1442 = vadd.f32 0.0, %v1441
      %v1443 = vpop.f32.mrf.mxu0
      %v1444 = vadd.f32 0.0, %v1443
      %1445 = vmatmul.bf16.gmra.mxu0 %v1357
      %v1446 = vpop.f32.mrf.mxu0
      %v1447 = vadd.f32 0.0, %v1446
      %v1448 = vpop.f32.mrf.mxu0
      %v1449 = vadd.f32 0.0, %v1448
      %1450 = vdwg.mxu0
      %v1451 = vadd.f32 %v1098, %v1372
      %v1452 = vadd.f32 %v1099, %v1374
      %v1453 = vadd.f32 %v1100, %v1377
      %v1454 = vadd.f32 %v1101, %v1379
      %v1455 = vadd.f32 %v1102, %v1382
      %v1456 = vadd.f32 %v1103, %v1384
      %v1457 = vadd.f32 %v1104, %v1387
      %v1458 = vadd.f32 %v1105, %v1389
      %v1459 = vadd.f32 %v1106, %v1392
      %v1460 = vadd.f32 %v1107, %v1394
      %v1461 = vadd.f32 %v1108, %v1397
      %v1462 = vadd.f32 %v1109, %v1399
      %v1463 = vadd.f32 %v1110, %v1402
      %v1464 = vadd.f32 %v1111, %v1404
      %v1465 = vadd.f32 %v1112, %v1407
      %v1466 = vadd.f32 %v1113, %v1409
      %v1467 = vadd.f32 %v1114, %v1412
      %v1468 = vadd.f32 %v1115, %v1414
      %v1469 = vadd.f32 %v1116, %v1417
      %v1470 = vadd.f32 %v1117, %v1419
      %v1471 = vadd.f32 %v1118, %v1422
      %v1472 = vadd.f32 %v1119, %v1424
      %v1473 = vadd.f32 %v1120, %v1427
      %v1474 = vadd.f32 %v1121, %v1429
      %v1475 = vadd.f32 %v1122, %v1432
      %v1476 = vadd.f32 %v1123, %v1434
      %v1477 = vadd.f32 %v1124, %v1437
      %v1478 = vadd.f32 %v1125, %v1439
      %v1479 = vadd.f32 %v1126, %v1442
      %v1480 = vadd.f32 %v1127, %v1444
      %v1481 = vadd.f32 %v1128, %v1447
      %v1482 = vadd.f32 %v1129, %v1449
      %s1483 = scalar_lea.vmem %s1, 6
      %v1484 = vld [vmem:[%s1483] sm:$0x3]
      %v1487 = vunpack.c.l.b16 %v256
      %v1488 = vunpack.c.l.b16 %v257
      %v1489 = vpack.c.b16 %v1488, %v1487
      %v1491 = vsel %vm347, %v1489, 0
      %v1494 = vsel %vm396, %v1484, 0
      %1496 = vmatpush.bf16.msra.mxu0 0
      %1497 = vmatpush.bf16.msra.mxu0 0
      %1498 = vmatpush.bf16.msra.mxu0 0
      %1499 = vmatpush.bf16.msra.mxu0 0
      %1500 = vmatpush.bf16.msra.mxu0 0
      %1501 = vmatpush.bf16.msra.mxu0 0
      %1502 = vmatpush.bf16.msra.mxu0 0
      %1503 = vmatpush.bf16.msra.mxu0 %v1494
      %1504 = vmatmul.bf16.gmra.mxu0 %v352
      %v1505 = vpop.f32.mrf.mxu0
      %v1506 = vadd.f32 0.0, %v1505
      %v1507 = vpop.f32.mrf.mxu0
      %v1508 = vadd.f32 0.0, %v1507
      %1509 = vmatmul.bf16.gmra.mxu0 %v355
      %v1510 = vpop.f32.mrf.mxu0
      %v1511 = vadd.f32 0.0, %v1510
      %v1512 = vpop.f32.mrf.mxu0
      %v1513 = vadd.f32 0.0, %v1512
      %1514 = vmatmul.bf16.gmra.mxu0 %v358
      %v1515 = vpop.f32.mrf.mxu0
      %v1516 = vadd.f32 0.0, %v1515
      %v1517 = vpop.f32.mrf.mxu0
      %v1518 = vadd.f32 0.0, %v1517
      %1519 = vmatmul.bf16.gmra.mxu0 %v361
      %v1520 = vpop.f32.mrf.mxu0
      %v1521 = vadd.f32 0.0, %v1520
      %v1522 = vpop.f32.mrf.mxu0
      %v1523 = vadd.f32 0.0, %v1522
      %1524 = vmatmul.bf16.gmra.mxu0 %v364
      %v1525 = vpop.f32.mrf.mxu0
      %v1526 = vadd.f32 0.0, %v1525
      %v1527 = vpop.f32.mrf.mxu0
      %v1528 = vadd.f32 0.0, %v1527
      %1529 = vmatmul.bf16.gmra.mxu0 %v367
      %v1530 = vpop.f32.mrf.mxu0
      %v1531 = vadd.f32 0.0, %v1530
      %v1532 = vpop.f32.mrf.mxu0
      %v1533 = vadd.f32 0.0, %v1532
      %1534 = vmatmul.bf16.gmra.mxu0 %v370
      %v1535 = vpop.f32.mrf.mxu0
      %v1536 = vadd.f32 0.0, %v1535
      %v1537 = vpop.f32.mrf.mxu0
      %v1538 = vadd.f32 0.0, %v1537
      %1539 = vmatmul.bf16.gmra.mxu0 %v373
      %v1540 = vpop.f32.mrf.mxu0
      %v1541 = vadd.f32 0.0, %v1540
      %v1542 = vpop.f32.mrf.mxu0
      %v1543 = vadd.f32 0.0, %v1542
      %1544 = vmatmul.bf16.gmra.mxu0 %v376
      %v1545 = vpop.f32.mrf.mxu0
      %v1546 = vadd.f32 0.0, %v1545
      %v1547 = vpop.f32.mrf.mxu0
      %v1548 = vadd.f32 0.0, %v1547
      %1549 = vmatmul.bf16.gmra.mxu0 %v379
      %v1550 = vpop.f32.mrf.mxu0
      %v1551 = vadd.f32 0.0, %v1550
      %v1552 = vpop.f32.mrf.mxu0
      %v1553 = vadd.f32 0.0, %v1552
      %1554 = vmatmul.bf16.gmra.mxu0 %v382
      %v1555 = vpop.f32.mrf.mxu0
      %v1556 = vadd.f32 0.0, %v1555
      %v1557 = vpop.f32.mrf.mxu0
      %v1558 = vadd.f32 0.0, %v1557
      %1559 = vmatmul.bf16.gmra.mxu0 %v385
      %v1560 = vpop.f32.mrf.mxu0
      %v1561 = vadd.f32 0.0, %v1560
      %v1562 = vpop.f32.mrf.mxu0
      %v1563 = vadd.f32 0.0, %v1562
      %1564 = vmatmul.bf16.gmra.mxu0 %v388
      %v1565 = vpop.f32.mrf.mxu0
      %v1566 = vadd.f32 0.0, %v1565
      %v1567 = vpop.f32.mrf.mxu0
      %v1568 = vadd.f32 0.0, %v1567
      %1569 = vmatmul.bf16.gmra.mxu0 %v391
      %v1570 = vpop.f32.mrf.mxu0
      %v1571 = vadd.f32 0.0, %v1570
      %v1572 = vpop.f32.mrf.mxu0
      %v1573 = vadd.f32 0.0, %v1572
      %1574 = vmatmul.bf16.gmra.mxu0 %v394
      %v1575 = vpop.f32.mrf.mxu0
      %v1576 = vadd.f32 0.0, %v1575
      %v1577 = vpop.f32.mrf.mxu0
      %v1578 = vadd.f32 0.0, %v1577
      %1579 = vmatmul.bf16.gmra.mxu0 %v1491
      %v1580 = vpop.f32.mrf.mxu0
      %v1581 = vadd.f32 0.0, %v1580
      %v1582 = vpop.f32.mrf.mxu0
      %v1583 = vadd.f32 0.0, %v1582
      %1584 = vdwg.mxu0
      %v1585 = vadd.f32 %v1451, %v1506
      %v1586 = vadd.f32 %v1452, %v1508
      %v1587 = vadd.f32 %v1453, %v1511
      %v1588 = vadd.f32 %v1454, %v1513
      %v1589 = vadd.f32 %v1455, %v1516
      %v1590 = vadd.f32 %v1456, %v1518
      %v1591 = vadd.f32 %v1457, %v1521
      %v1592 = vadd.f32 %v1458, %v1523
      %v1593 = vadd.f32 %v1459, %v1526
      %v1594 = vadd.f32 %v1460, %v1528
      %v1595 = vadd.f32 %v1461, %v1531
      %v1596 = vadd.f32 %v1462, %v1533
      %v1597 = vadd.f32 %v1463, %v1536
      %v1598 = vadd.f32 %v1464, %v1538
      %v1599 = vadd.f32 %v1465, %v1541
      %v1600 = vadd.f32 %v1466, %v1543
      %v1601 = vadd.f32 %v1467, %v1546
      %v1602 = vadd.f32 %v1468, %v1548
      %v1603 = vadd.f32 %v1469, %v1551
      %v1604 = vadd.f32 %v1470, %v1553
      %v1605 = vadd.f32 %v1471, %v1556
      %v1606 = vadd.f32 %v1472, %v1558
      %v1607 = vadd.f32 %v1473, %v1561
      %v1608 = vadd.f32 %v1474, %v1563
      %v1609 = vadd.f32 %v1475, %v1566
      %v1610 = vadd.f32 %v1476, %v1568
      %v1611 = vadd.f32 %v1477, %v1571
      %v1612 = vadd.f32 %v1478, %v1573
      %v1613 = vadd.f32 %v1479, %v1576
      %v1614 = vadd.f32 %v1480, %v1578
      %v1615 = vadd.f32 %v1481, %v1581
      %v1616 = vadd.f32 %v1482, %v1583
      %v1618 = vshrl.u32 %v256, 16
      %v1620 = vrot.slane %v1618, 4
      %v1621 = vshll.u32 %v256, 16
      %v1623 = vrot.slane %v1621, 5
      %v1624 = vor.u32 %v1620, %v1623
      %v1625 = vrot.slane %v1624, 4
      %v1627 = vshll.u32 %v257, 16
      %v1629 = vrot.slane %v1627, 5
      %v1630 = vsel %vm523, %v1625, %v1629
      %v1631 = vshrl.u32 %v257, 16
      %v1633 = vrot.slane %v1631, 4
      %v1634 = vor.u32 %v1633, %v1629
      %v1635 = vrot.slane %v1634, 4
      %v1637 = vshll.u32 %v258, 16
      %v1639 = vrot.slane %v1637, 5
      %v1640 = vsel %vm523, %v1635, %v1639
      %s1641 = scalar_lea.vmem %s1, 8
      %v1642 = vld [vmem:[%s1641] sm:$0x3]
      %v1643 = vunpack.c.l.b16 %v1630
      %v1644 = vunpack.c.l.b16 %v1640
      %v1645 = vpack.c.b16 %v1644, %v1643
      %v1647 = vsel %vm347, %v1645, 0
      %v1650 = vsel %vm396, %v1642, 0
      %1652 = vmatpush.bf16.msra.mxu0 0
      %1653 = vmatpush.bf16.msra.mxu0 0
      %1654 = vmatpush.bf16.msra.mxu0 0
      %1655 = vmatpush.bf16.msra.mxu0 0
      %1656 = vmatpush.bf16.msra.mxu0 0
      %1657 = vmatpush.bf16.msra.mxu0 0
      %1658 = vmatpush.bf16.msra.mxu0 0
      %1659 = vmatpush.bf16.msra.mxu0 %v1650
      %1660 = vmatmul.bf16.gmra.mxu0 %v962
      %v1661 = vpop.f32.mrf.mxu0
      %v1662 = vadd.f32 0.0, %v1661
      %v1663 = vpop.f32.mrf.mxu0
      %v1664 = vadd.f32 0.0, %v1663
      %1665 = vmatmul.bf16.gmra.mxu0 %v965
      %v1666 = vpop.f32.mrf.mxu0
      %v1667 = vadd.f32 0.0, %v1666
      %v1668 = vpop.f32.mrf.mxu0
      %v1669 = vadd.f32 0.0, %v1668
      %1670 = vmatmul.bf16.gmra.mxu0 %v968
      %v1671 = vpop.f32.mrf.mxu0
      %v1672 = vadd.f32 0.0, %v1671
      %v1673 = vpop.f32.mrf.mxu0
      %v1674 = vadd.f32 0.0, %v1673
      %1675 = vmatmul.bf16.gmra.mxu0 %v971
      %v1676 = vpop.f32.mrf.mxu0
      %v1677 = vadd.f32 0.0, %v1676
      %v1678 = vpop.f32.mrf.mxu0
      %v1679 = vadd.f32 0.0, %v1678
      %1680 = vmatmul.bf16.gmra.mxu0 %v974
      %v1681 = vpop.f32.mrf.mxu0
      %v1682 = vadd.f32 0.0, %v1681
      %v1683 = vpop.f32.mrf.mxu0
      %v1684 = vadd.f32 0.0, %v1683
      %1685 = vmatmul.bf16.gmra.mxu0 %v977
      %v1686 = vpop.f32.mrf.mxu0
      %v1687 = vadd.f32 0.0, %v1686
      %v1688 = vpop.f32.mrf.mxu0
      %v1689 = vadd.f32 0.0, %v1688
      %1690 = vmatmul.bf16.gmra.mxu0 %v980
      %v1691 = vpop.f32.mrf.mxu0
      %v1692 = vadd.f32 0.0, %v1691
      %v1693 = vpop.f32.mrf.mxu0
      %v1694 = vadd.f32 0.0, %v1693
      %1695 = vmatmul.bf16.gmra.mxu0 %v983
      %v1696 = vpop.f32.mrf.mxu0
      %v1697 = vadd.f32 0.0, %v1696
      %v1698 = vpop.f32.mrf.mxu0
      %v1699 = vadd.f32 0.0, %v1698
      %1700 = vmatmul.bf16.gmra.mxu0 %v986
      %v1701 = vpop.f32.mrf.mxu0
      %v1702 = vadd.f32 0.0, %v1701
      %v1703 = vpop.f32.mrf.mxu0
      %v1704 = vadd.f32 0.0, %v1703
      %1705 = vmatmul.bf16.gmra.mxu0 %v989
      %v1706 = vpop.f32.mrf.mxu0
      %v1707 = vadd.f32 0.0, %v1706
      %v1708 = vpop.f32.mrf.mxu0
      %v1709 = vadd.f32 0.0, %v1708
      %1710 = vmatmul.bf16.gmra.mxu0 %v992
      %v1711 = vpop.f32.mrf.mxu0
      %v1712 = vadd.f32 0.0, %v1711
      %v1713 = vpop.f32.mrf.mxu0
      %v1714 = vadd.f32 0.0, %v1713
      %1715 = vmatmul.bf16.gmra.mxu0 %v995
      %v1716 = vpop.f32.mrf.mxu0
      %v1717 = vadd.f32 0.0, %v1716
      %v1718 = vpop.f32.mrf.mxu0
      %v1719 = vadd.f32 0.0, %v1718
      %1720 = vmatmul.bf16.gmra.mxu0 %v998
      %v1721 = vpop.f32.mrf.mxu0
      %v1722 = vadd.f32 0.0, %v1721
      %v1723 = vpop.f32.mrf.mxu0
      %v1724 = vadd.f32 0.0, %v1723
      %1725 = vmatmul.bf16.gmra.mxu0 %v1001
      %v1726 = vpop.f32.mrf.mxu0
      %v1727 = vadd.f32 0.0, %v1726
      %v1728 = vpop.f32.mrf.mxu0
      %v1729 = vadd.f32 0.0, %v1728
      %1730 = vmatmul.bf16.gmra.mxu0 %v1004
      %v1731 = vpop.f32.mrf.mxu0
      %v1732 = vadd.f32 0.0, %v1731
      %v1733 = vpop.f32.mrf.mxu0
      %v1734 = vadd.f32 0.0, %v1733
      %1735 = vmatmul.bf16.gmra.mxu0 %v1647
      %v1736 = vpop.f32.mrf.mxu0
      %v1737 = vadd.f32 0.0, %v1736
      %v1738 = vpop.f32.mrf.mxu0
      %v1739 = vadd.f32 0.0, %v1738
      %1740 = vdwg.mxu0
      %v1741 = vadd.f32 %v1585, %v1662
      %v1742 = vadd.f32 %v1586, %v1664
      %v1743 = vadd.f32 %v1587, %v1667
      %v1744 = vadd.f32 %v1588, %v1669
      %v1745 = vadd.f32 %v1589, %v1672
      %v1746 = vadd.f32 %v1590, %v1674
      %v1747 = vadd.f32 %v1591, %v1677
      %v1748 = vadd.f32 %v1592, %v1679
      %v1749 = vadd.f32 %v1593, %v1682
      %v1750 = vadd.f32 %v1594, %v1684
      %v1751 = vadd.f32 %v1595, %v1687
      %v1752 = vadd.f32 %v1596, %v1689
      %v1753 = vadd.f32 %v1597, %v1692
      %v1754 = vadd.f32 %v1598, %v1694
      %v1755 = vadd.f32 %v1599, %v1697
      %v1756 = vadd.f32 %v1600, %v1699
      %v1757 = vadd.f32 %v1601, %v1702
      %v1758 = vadd.f32 %v1602, %v1704
      %v1759 = vadd.f32 %v1603, %v1707
      %v1760 = vadd.f32 %v1604, %v1709
      %v1761 = vadd.f32 %v1605, %v1712
      %v1762 = vadd.f32 %v1606, %v1714
      %v1763 = vadd.f32 %v1607, %v1717
      %v1764 = vadd.f32 %v1608, %v1719
      %v1765 = vadd.f32 %v1609, %v1722
      %v1766 = vadd.f32 %v1610, %v1724
      %v1767 = vadd.f32 %v1611, %v1727
      %v1768 = vadd.f32 %v1612, %v1729
      %v1769 = vadd.f32 %v1613, %v1732
      %v1770 = vadd.f32 %v1614, %v1734
      %v1771 = vadd.f32 %v1615, %v1737
      %v1772 = vadd.f32 %v1616, %v1739
      %v1774 = vrot.slane %v256, 5
      %v1775 = vrot.slane %v1774, 4
      %v1776 = vrot.slane %v257, 5
      %v1777 = vsel %vm1148, %v1775, %v1776
      %v1778 = vrot.slane %v1776, 4
      %v1779 = vrot.slane %v258, 5
      %v1780 = vsel %vm1148, %v1778, %v1779
      %s1781 = scalar_lea.vmem %s1, 10
      %v1782 = vld [vmem:[%s1781] sm:$0x3]
      %v1783 = vunpack.c.l.b16 %v1777
      %v1784 = vunpack.c.l.b16 %v1780
      %v1785 = vpack.c.b16 %v1784, %v1783
      %v1787 = vsel %vm347, %v1785, 0
      %v1790 = vsel %vm396, %v1782, 0
      %1792 = vmatpush.bf16.msra.mxu0 0
      %1793 = vmatpush.bf16.msra.mxu0 0
      %1794 = vmatpush.bf16.msra.mxu0 0
      %1795 = vmatpush.bf16.msra.mxu0 0
      %1796 = vmatpush.bf16.msra.mxu0 0
      %1797 = vmatpush.bf16.msra.mxu0 0
      %1798 = vmatpush.bf16.msra.mxu0 0
      %1799 = vmatpush.bf16.msra.mxu0 %v1790
      %1800 = vmatmul.bf16.gmra.mxu0 %v1315
      %v1801 = vpop.f32.mrf.mxu0
      %v1802 = vadd.f32 0.0, %v1801
      %v1803 = vpop.f32.mrf.mxu0
      %v1804 = vadd.f32 0.0, %v1803
      %1805 = vmatmul.bf16.gmra.mxu0 %v1318
      %v1806 = vpop.f32.mrf.mxu0
      %v1807 = vadd.f32 0.0, %v1806
      %v1808 = vpop.f32.mrf.mxu0
      %v1809 = vadd.f32 0.0, %v1808
      %1810 = vmatmul.bf16.gmra.mxu0 %v1321
      %v1811 = vpop.f32.mrf.mxu0
      %v1812 = vadd.f32 0.0, %v1811
      %v1813 = vpop.f32.mrf.mxu0
      %v1814 = vadd.f32 0.0, %v1813
      %1815 = vmatmul.bf16.gmra.mxu0 %v1324
      %v1816 = vpop.f32.mrf.mxu0
      %v1817 = vadd.f32 0.0, %v1816
      %v1818 = vpop.f32.mrf.mxu0
      %v1819 = vadd.f32 0.0, %v1818
      %1820 = vmatmul.bf16.gmra.mxu0 %v1327
      %v1821 = vpop.f32.mrf.mxu0
      %v1822 = vadd.f32 0.0, %v1821
      %v1823 = vpop.f32.mrf.mxu0
      %v1824 = vadd.f32 0.0, %v1823
      %1825 = vmatmul.bf16.gmra.mxu0 %v1330
      %v1826 = vpop.f32.mrf.mxu0
      %v1827 = vadd.f32 0.0, %v1826
      %v1828 = vpop.f32.mrf.mxu0
      %v1829 = vadd.f32 0.0, %v1828
      %1830 = vmatmul.bf16.gmra.mxu0 %v1333
      %v1831 = vpop.f32.mrf.mxu0
      %v1832 = vadd.f32 0.0, %v1831
      %v1833 = vpop.f32.mrf.mxu0
      %v1834 = vadd.f32 0.0, %v1833
      %1835 = vmatmul.bf16.gmra.mxu0 %v1336
      %v1836 = vpop.f32.mrf.mxu0
      %v1837 = vadd.f32 0.0, %v1836
      %v1838 = vpop.f32.mrf.mxu0
      %v1839 = vadd.f32 0.0, %v1838
      %1840 = vmatmul.bf16.gmra.mxu0 %v1339
      %v1841 = vpop.f32.mrf.mxu0
      %v1842 = vadd.f32 0.0, %v1841
      %v1843 = vpop.f32.mrf.mxu0
      %v1844 = vadd.f32 0.0, %v1843
      %1845 = vmatmul.bf16.gmra.mxu0 %v1342
      %v1846 = vpop.f32.mrf.mxu0
      %v1847 = vadd.f32 0.0, %v1846
      %v1848 = vpop.f32.mrf.mxu0
      %v1849 = vadd.f32 0.0, %v1848
      %1850 = vmatmul.bf16.gmra.mxu0 %v1345
      %v1851 = vpop.f32.mrf.mxu0
      %v1852 = vadd.f32 0.0, %v1851
      %v1853 = vpop.f32.mrf.mxu0
      %v1854 = vadd.f32 0.0, %v1853
      %1855 = vmatmul.bf16.gmra.mxu0 %v1348
      %v1856 = vpop.f32.mrf.mxu0
      %v1857 = vadd.f32 0.0, %v1856
      %v1858 = vpop.f32.mrf.mxu0
      %v1859 = vadd.f32 0.0, %v1858
      %1860 = vmatmul.bf16.gmra.mxu0 %v1351
      %v1861 = vpop.f32.mrf.mxu0
      %v1862 = vadd.f32 0.0, %v1861
      %v1863 = vpop.f32.mrf.mxu0
      %v1864 = vadd.f32 0.0, %v1863
      %1865 = vmatmul.bf16.gmra.mxu0 %v1354
      %v1866 = vpop.f32.mrf.mxu0
      %v1867 = vadd.f32 0.0, %v1866
      %v1868 = vpop.f32.mrf.mxu0
      %v1869 = vadd.f32 0.0, %v1868
      %1870 = vmatmul.bf16.gmra.mxu0 %v1357
      %v1871 = vpop.f32.mrf.mxu0
      %v1872 = vadd.f32 0.0, %v1871
      %v1873 = vpop.f32.mrf.mxu0
      %v1874 = vadd.f32 0.0, %v1873
      %1875 = vmatmul.bf16.gmra.mxu0 %v1787
      %v1876 = vpop.f32.mrf.mxu0
      %v1877 = vadd.f32 0.0, %v1876
      %v1878 = vpop.f32.mrf.mxu0
      %v1879 = vadd.f32 0.0, %v1878
      %1880 = vdwg.mxu0
      %v1881 = vadd.f32 %v1741, %v1802
      %v1882 = vadd.f32 %v1742, %v1804
      %v1883 = vadd.f32 %v1743, %v1807
      %v1884 = vadd.f32 %v1744, %v1809
      %v1885 = vadd.f32 %v1745, %v1812
      %v1886 = vadd.f32 %v1746, %v1814
      %v1887 = vadd.f32 %v1747, %v1817
      %v1888 = vadd.f32 %v1748, %v1819
      %v1889 = vadd.f32 %v1749, %v1822
      %v1890 = vadd.f32 %v1750, %v1824
      %v1891 = vadd.f32 %v1751, %v1827
      %v1892 = vadd.f32 %v1752, %v1829
      %v1893 = vadd.f32 %v1753, %v1832
      %v1894 = vadd.f32 %v1754, %v1834
      %v1895 = vadd.f32 %v1755, %v1837
      %v1896 = vadd.f32 %v1756, %v1839
      %v1897 = vadd.f32 %v1757, %v1842
      %v1898 = vadd.f32 %v1758, %v1844
      %v1899 = vadd.f32 %v1759, %v1847
      %v1900 = vadd.f32 %v1760, %v1849
      %v1901 = vadd.f32 %v1761, %v1852
      %v1902 = vadd.f32 %v1762, %v1854
      %v1903 = vadd.f32 %v1763, %v1857
      %v1904 = vadd.f32 %v1764, %v1859
      %v1905 = vadd.f32 %v1765, %v1862
      %v1906 = vadd.f32 %v1766, %v1864
      %v1907 = vadd.f32 %v1767, %v1867
      %v1908 = vadd.f32 %v1768, %v1869
      %v1909 = vadd.f32 %v1769, %v1872
      %v1910 = vadd.f32 %v1770, %v1874
      %v1911 = vadd.f32 %v1771, %v1877
      %v1912 = vadd.f32 %v1772, %v1879
      %s1913 = scalar_lea.vmem %s1, 12
      %v1914 = vld [vmem:[%s1913] sm:$0x3]
      %v1917 = vunpack.c.l.b16 %v259
      %v1918 = vunpack.c.l.b16 %v260
      %v1919 = vpack.c.b16 %v1918, %v1917
      %v1921 = vsel %vm347, %v1919, 0
      %v1924 = vsel %vm396, %v1914, 0
      %1926 = vmatpush.bf16.msra.mxu0 0
      %1927 = vmatpush.bf16.msra.mxu0 0
      %1928 = vmatpush.bf16.msra.mxu0 0
      %1929 = vmatpush.bf16.msra.mxu0 0
      %1930 = vmatpush.bf16.msra.mxu0 0
      %1931 = vmatpush.bf16.msra.mxu0 0
      %1932 = vmatpush.bf16.msra.mxu0 0
      %1933 = vmatpush.bf16.msra.mxu0 %v1924
      %1934 = vmatmul.bf16.gmra.mxu0 %v355
      %v1935 = vpop.f32.mrf.mxu0
      %v1936 = vadd.f32 0.0, %v1935
      %v1937 = vpop.f32.mrf.mxu0
      %v1938 = vadd.f32 0.0, %v1937
      %1939 = vmatmul.bf16.gmra.mxu0 %v358
      %v1940 = vpop.f32.mrf.mxu0
      %v1941 = vadd.f32 0.0, %v1940
      %v1942 = vpop.f32.mrf.mxu0
      %v1943 = vadd.f32 0.0, %v1942
      %1944 = vmatmul.bf16.gmra.mxu0 %v361
      %v1945 = vpop.f32.mrf.mxu0
      %v1946 = vadd.f32 0.0, %v1945
      %v1947 = vpop.f32.mrf.mxu0
      %v1948 = vadd.f32 0.0, %v1947
      %1949 = vmatmul.bf16.gmra.mxu0 %v364
      %v1950 = vpop.f32.mrf.mxu0
      %v1951 = vadd.f32 0.0, %v1950
      %v1952 = vpop.f32.mrf.mxu0
      %v1953 = vadd.f32 0.0, %v1952
      %1954 = vmatmul.bf16.gmra.mxu0 %v367
      %v1955 = vpop.f32.mrf.mxu0
      %v1956 = vadd.f32 0.0, %v1955
      %v1957 = vpop.f32.mrf.mxu0
      %v1958 = vadd.f32 0.0, %v1957
      %1959 = vmatmul.bf16.gmra.mxu0 %v370
      %v1960 = vpop.f32.mrf.mxu0
      %v1961 = vadd.f32 0.0, %v1960
      %v1962 = vpop.f32.mrf.mxu0
      %v1963 = vadd.f32 0.0, %v1962
      %1964 = vmatmul.bf16.gmra.mxu0 %v373
      %v1965 = vpop.f32.mrf.mxu0
      %v1966 = vadd.f32 0.0, %v1965
      %v1967 = vpop.f32.mrf.mxu0
      %v1968 = vadd.f32 0.0, %v1967
      %1969 = vmatmul.bf16.gmra.mxu0 %v376
      %v1970 = vpop.f32.mrf.mxu0
      %v1971 = vadd.f32 0.0, %v1970
      %v1972 = vpop.f32.mrf.mxu0
      %v1973 = vadd.f32 0.0, %v1972
      %1974 = vmatmul.bf16.gmra.mxu0 %v379
      %v1975 = vpop.f32.mrf.mxu0
      %v1976 = vadd.f32 0.0, %v1975
      %v1977 = vpop.f32.mrf.mxu0
      %v1978 = vadd.f32 0.0, %v1977
      %1979 = vmatmul.bf16.gmra.mxu0 %v382
      %v1980 = vpop.f32.mrf.mxu0
      %v1981 = vadd.f32 0.0, %v1980
      %v1982 = vpop.f32.mrf.mxu0
      %v1983 = vadd.f32 0.0, %v1982
      %1984 = vmatmul.bf16.gmra.mxu0 %v385
      %v1985 = vpop.f32.mrf.mxu0
      %v1986 = vadd.f32 0.0, %v1985
      %v1987 = vpop.f32.mrf.mxu0
      %v1988 = vadd.f32 0.0, %v1987
      %1989 = vmatmul.bf16.gmra.mxu0 %v388
      %v1990 = vpop.f32.mrf.mxu0
      %v1991 = vadd.f32 0.0, %v1990
      %v1992 = vpop.f32.mrf.mxu0
      %v1993 = vadd.f32 0.0, %v1992
      %1994 = vmatmul.bf16.gmra.mxu0 %v391
      %v1995 = vpop.f32.mrf.mxu0
      %v1996 = vadd.f32 0.0, %v1995
      %v1997 = vpop.f32.mrf.mxu0
      %v1998 = vadd.f32 0.0, %v1997
      %1999 = vmatmul.bf16.gmra.mxu0 %v394
      %v2000 = vpop.f32.mrf.mxu0
      %v2001 = vadd.f32 0.0, %v2000
      %v2002 = vpop.f32.mrf.mxu0
      %v2003 = vadd.f32 0.0, %v2002
      %2004 = vmatmul.bf16.gmra.mxu0 %v1491
      %v2005 = vpop.f32.mrf.mxu0
      %v2006 = vadd.f32 0.0, %v2005
      %v2007 = vpop.f32.mrf.mxu0
      %v2008 = vadd.f32 0.0, %v2007
      %2009 = vmatmul.bf16.gmra.mxu0 %v1921
      %v2010 = vpop.f32.mrf.mxu0
      %v2011 = vadd.f32 0.0, %v2010
      %v2012 = vpop.f32.mrf.mxu0
      %v2013 = vadd.f32 0.0, %v2012
      %2014 = vdwg.mxu0
      %v2015 = vadd.f32 %v1881, %v1936
      %v2016 = vadd.f32 %v1882, %v1938
      %v2017 = vadd.f32 %v1883, %v1941
      %v2018 = vadd.f32 %v1884, %v1943
      %v2019 = vadd.f32 %v1885, %v1946
      %v2020 = vadd.f32 %v1886, %v1948
      %v2021 = vadd.f32 %v1887, %v1951
      %v2022 = vadd.f32 %v1888, %v1953
      %v2023 = vadd.f32 %v1889, %v1956
      %v2024 = vadd.f32 %v1890, %v1958
      %v2025 = vadd.f32 %v1891, %v1961
      %v2026 = vadd.f32 %v1892, %v1963
      %v2027 = vadd.f32 %v1893, %v1966
      %v2028 = vadd.f32 %v1894, %v1968
      %v2029 = vadd.f32 %v1895, %v1971
      %v2030 = vadd.f32 %v1896, %v1973
      %v2031 = vadd.f32 %v1897, %v1976
      %v2032 = vadd.f32 %v1898, %v1978
      %v2033 = vadd.f32 %v1899, %v1981
      %v2034 = vadd.f32 %v1900, %v1983
      %v2035 = vadd.f32 %v1901, %v1986
      %v2036 = vadd.f32 %v1902, %v1988
      %v2037 = vadd.f32 %v1903, %v1991
      %v2038 = vadd.f32 %v1904, %v1993
      %v2039 = vadd.f32 %v1905, %v1996
      %v2040 = vadd.f32 %v1906, %v1998
      %v2041 = vadd.f32 %v1907, %v2001
      %v2042 = vadd.f32 %v1908, %v2003
      %v2043 = vadd.f32 %v1909, %v2006
      %v2044 = vadd.f32 %v1910, %v2008
      %v2045 = vadd.f32 %v1911, %v2011
      %v2046 = vadd.f32 %v1912, %v2013
      %v2048 = vshrl.u32 %v259, 16
      %v2050 = vrot.slane %v2048, 4
      %v2051 = vshll.u32 %v259, 16
      %v2053 = vrot.slane %v2051, 5
      %v2054 = vor.u32 %v2050, %v2053
      %v2055 = vrot.slane %v2054, 4
      %v2057 = vshll.u32 %v260, 16
      %v2059 = vrot.slane %v2057, 5
      %v2060 = vsel %vm523, %v2055, %v2059
      %v2061 = vshrl.u32 %v260, 16
      %v2063 = vrot.slane %v2061, 4
      %v2064 = vor.u32 %v2063, %v2059
      %v2065 = vrot.slane %v2064, 4
      %v2067 = vshll.u32 %v261, 16
      %v2069 = vrot.slane %v2067, 5
      %v2070 = vsel %vm523, %v2065, %v2069
      %s2071 = scalar_lea.vmem %s1, 14
      %v2072 = vld [vmem:[%s2071] sm:$0x3]
      %v2073 = vunpack.c.l.b16 %v2060
      %v2074 = vunpack.c.l.b16 %v2070
      %v2075 = vpack.c.b16 %v2074, %v2073
      %v2077 = vsel %vm347, %v2075, 0
      %v2080 = vsel %vm396, %v2072, 0
      %2082 = vmatpush.bf16.msra.mxu0 0
      %2083 = vmatpush.bf16.msra.mxu0 0
      %2084 = vmatpush.bf16.msra.mxu0 0
      %2085 = vmatpush.bf16.msra.mxu0 0
      %2086 = vmatpush.bf16.msra.mxu0 0
      %2087 = vmatpush.bf16.msra.mxu0 0
      %2088 = vmatpush.bf16.msra.mxu0 0
      %2089 = vmatpush.bf16.msra.mxu0 %v2080
      %2090 = vmatmul.bf16.gmra.mxu0 %v965
      %v2091 = vpop.f32.mrf.mxu0
      %v2092 = vadd.f32 0.0, %v2091
      %v2093 = vpop.f32.mrf.mxu0
      %v2094 = vadd.f32 0.0, %v2093
      %2095 = vmatmul.bf16.gmra.mxu0 %v968
      %v2096 = vpop.f32.mrf.mxu0
      %v2097 = vadd.f32 0.0, %v2096
      %v2098 = vpop.f32.mrf.mxu0
      %v2099 = vadd.f32 0.0, %v2098
      %2100 = vmatmul.bf16.gmra.mxu0 %v971
      %v2101 = vpop.f32.mrf.mxu0
      %v2102 = vadd.f32 0.0, %v2101
      %v2103 = vpop.f32.mrf.mxu0
      %v2104 = vadd.f32 0.0, %v2103
      %2105 = vmatmul.bf16.gmra.mxu0 %v974
      %v2106 = vpop.f32.mrf.mxu0
      %v2107 = vadd.f32 0.0, %v2106
      %v2108 = vpop.f32.mrf.mxu0
      %v2109 = vadd.f32 0.0, %v2108
      %2110 = vmatmul.bf16.gmra.mxu0 %v977
      %v2111 = vpop.f32.mrf.mxu0
      %v2112 = vadd.f32 0.0, %v2111
      %v2113 = vpop.f32.mrf.mxu0
      %v2114 = vadd.f32 0.0, %v2113
      %2115 = vmatmul.bf16.gmra.mxu0 %v980
      %v2116 = vpop.f32.mrf.mxu0
      %v2117 = vadd.f32 0.0, %v2116
      %v2118 = vpop.f32.mrf.mxu0
      %v2119 = vadd.f32 0.0, %v2118
      %2120 = vmatmul.bf16.gmra.mxu0 %v983
      %v2121 = vpop.f32.mrf.mxu0
      %v2122 = vadd.f32 0.0, %v2121
      %v2123 = vpop.f32.mrf.mxu0
      %v2124 = vadd.f32 0.0, %v2123
      %2125 = vmatmul.bf16.gmra.mxu0 %v986
      %v2126 = vpop.f32.mrf.mxu0
      %v2127 = vadd.f32 0.0, %v2126
      %v2128 = vpop.f32.mrf.mxu0
      %v2129 = vadd.f32 0.0, %v2128
      %2130 = vmatmul.bf16.gmra.mxu0 %v989
      %v2131 = vpop.f32.mrf.mxu0
      %v2132 = vadd.f32 0.0, %v2131
      %v2133 = vpop.f32.mrf.mxu0
      %v2134 = vadd.f32 0.0, %v2133
      %2135 = vmatmul.bf16.gmra.mxu0 %v992
      %v2136 = vpop.f32.mrf.mxu0
      %v2137 = vadd.f32 0.0, %v2136
      %v2138 = vpop.f32.mrf.mxu0
      %v2139 = vadd.f32 0.0, %v2138
      %2140 = vmatmul.bf16.gmra.mxu0 %v995
      %v2141 = vpop.f32.mrf.mxu0
      %v2142 = vadd.f32 0.0, %v2141
      %v2143 = vpop.f32.mrf.mxu0
      %v2144 = vadd.f32 0.0, %v2143
      %2145 = vmatmul.bf16.gmra.mxu0 %v998
      %v2146 = vpop.f32.mrf.mxu0
      %v2147 = vadd.f32 0.0, %v2146
      %v2148 = vpop.f32.mrf.mxu0
      %v2149 = vadd.f32 0.0, %v2148
      %2150 = vmatmul.bf16.gmra.mxu0 %v1001
      %v2151 = vpop.f32.mrf.mxu0
      %v2152 = vadd.f32 0.0, %v2151
      %v2153 = vpop.f32.mrf.mxu0
      %v2154 = vadd.f32 0.0, %v2153
      %2155 = vmatmul.bf16.gmra.mxu0 %v1004
      %v2156 = vpop.f32.mrf.mxu0
      %v2157 = vadd.f32 0.0, %v2156
      %v2158 = vpop.f32.mrf.mxu0
      %v2159 = vadd.f32 0.0, %v2158
      %2160 = vmatmul.bf16.gmra.mxu0 %v1647
      %v2161 = vpop.f32.mrf.mxu0
      %v2162 = vadd.f32 0.0, %v2161
      %v2163 = vpop.f32.mrf.mxu0
      %v2164 = vadd.f32 0.0, %v2163
      %2165 = vmatmul.bf16.gmra.mxu0 %v2077
      %v2166 = vpop.f32.mrf.mxu0
      %v2167 = vadd.f32 0.0, %v2166
      %v2168 = vpop.f32.mrf.mxu0
      %v2169 = vadd.f32 0.0, %v2168
      %2170 = vdwg.mxu0
      %v2171 = vadd.f32 %v2015, %v2092
      %v2172 = vadd.f32 %v2016, %v2094
      %v2173 = vadd.f32 %v2017, %v2097
      %v2174 = vadd.f32 %v2018, %v2099
      %v2175 = vadd.f32 %v2019, %v2102
      %v2176 = vadd.f32 %v2020, %v2104
      %v2177 = vadd.f32 %v2021, %v2107
      %v2178 = vadd.f32 %v2022, %v2109
      %v2179 = vadd.f32 %v2023, %v2112
      %v2180 = vadd.f32 %v2024, %v2114
      %v2181 = vadd.f32 %v2025, %v2117
      %v2182 = vadd.f32 %v2026, %v2119
      %v2183 = vadd.f32 %v2027, %v2122
      %v2184 = vadd.f32 %v2028, %v2124
      %v2185 = vadd.f32 %v2029, %v2127
      %v2186 = vadd.f32 %v2030, %v2129
      %v2187 = vadd.f32 %v2031, %v2132
      %v2188 = vadd.f32 %v2032, %v2134
      %v2189 = vadd.f32 %v2033, %v2137
      %v2190 = vadd.f32 %v2034, %v2139
      %v2191 = vadd.f32 %v2035, %v2142
      %v2192 = vadd.f32 %v2036, %v2144
      %v2193 = vadd.f32 %v2037, %v2147
      %v2194 = vadd.f32 %v2038, %v2149
      %v2195 = vadd.f32 %v2039, %v2152
      %v2196 = vadd.f32 %v2040, %v2154
      %v2197 = vadd.f32 %v2041, %v2157
      %v2198 = vadd.f32 %v2042, %v2159
      %v2199 = vadd.f32 %v2043, %v2162
      %v2200 = vadd.f32 %v2044, %v2164
      %v2201 = vadd.f32 %v2045, %v2167
      %v2202 = vadd.f32 %v2046, %v2169
      %v2204 = vrot.slane %v259, 5
      %v2205 = vrot.slane %v2204, 4
      %v2206 = vrot.slane %v260, 5
      %v2207 = vsel %vm1148, %v2205, %v2206
      %v2208 = vrot.slane %v2206, 4
      %v2209 = vrot.slane %v261, 5
      %v2210 = vsel %vm1148, %v2208, %v2209
      %s2211 = scalar_lea.vmem %s1, 16
      %v2212 = vld [vmem:[%s2211] sm:$0x3]
      %v2213 = vunpack.c.l.b16 %v2207
      %v2214 = vunpack.c.l.b16 %v2210
      %v2215 = vpack.c.b16 %v2214, %v2213
      %v2217 = vsel %vm347, %v2215, 0
      %v2220 = vsel %vm396, %v2212, 0
      %2222 = vmatpush.bf16.msra.mxu0 0
      %2223 = vmatpush.bf16.msra.mxu0 0
      %2224 = vmatpush.bf16.msra.mxu0 0
      %2225 = vmatpush.bf16.msra.mxu0 0
      %2226 = vmatpush.bf16.msra.mxu0 0
      %2227 = vmatpush.bf16.msra.mxu0 0
      %2228 = vmatpush.bf16.msra.mxu0 0
      %2229 = vmatpush.bf16.msra.mxu0 %v2220
      %2230 = vmatmul.bf16.gmra.mxu0 %v1318
      %v2231 = vpop.f32.mrf.mxu0
      %v2232 = vadd.f32 0.0, %v2231
      %v2233 = vpop.f32.mrf.mxu0
      %v2234 = vadd.f32 0.0, %v2233
      %2235 = vmatmul.bf16.gmra.mxu0 %v1321
      %v2236 = vpop.f32.mrf.mxu0
      %v2237 = vadd.f32 0.0, %v2236
      %v2238 = vpop.f32.mrf.mxu0
      %v2239 = vadd.f32 0.0, %v2238
      %2240 = vmatmul.bf16.gmra.mxu0 %v1324
      %v2241 = vpop.f32.mrf.mxu0
      %v2242 = vadd.f32 0.0, %v2241
      %v2243 = vpop.f32.mrf.mxu0
      %v2244 = vadd.f32 0.0, %v2243
      %2245 = vmatmul.bf16.gmra.mxu0 %v1327
      %v2246 = vpop.f32.mrf.mxu0
      %v2247 = vadd.f32 0.0, %v2246
      %v2248 = vpop.f32.mrf.mxu0
      %v2249 = vadd.f32 0.0, %v2248
      %2250 = vmatmul.bf16.gmra.mxu0 %v1330
      %v2251 = vpop.f32.mrf.mxu0
      %v2252 = vadd.f32 0.0, %v2251
      %v2253 = vpop.f32.mrf.mxu0
      %v2254 = vadd.f32 0.0, %v2253
      %2255 = vmatmul.bf16.gmra.mxu0 %v1333
      %v2256 = vpop.f32.mrf.mxu0
      %v2257 = vadd.f32 0.0, %v2256
      %v2258 = vpop.f32.mrf.mxu0
      %v2259 = vadd.f32 0.0, %v2258
      %2260 = vmatmul.bf16.gmra.mxu0 %v1336
      %v2261 = vpop.f32.mrf.mxu0
      %v2262 = vadd.f32 0.0, %v2261
      %v2263 = vpop.f32.mrf.mxu0
      %v2264 = vadd.f32 0.0, %v2263
      %2265 = vmatmul.bf16.gmra.mxu0 %v1339
      %v2266 = vpop.f32.mrf.mxu0
      %v2267 = vadd.f32 0.0, %v2266
      %v2268 = vpop.f32.mrf.mxu0
      %v2269 = vadd.f32 0.0, %v2268
      %2270 = vmatmul.bf16.gmra.mxu0 %v1342
      %v2271 = vpop.f32.mrf.mxu0
      %v2272 = vadd.f32 0.0, %v2271
      %v2273 = vpop.f32.mrf.mxu0
      %v2274 = vadd.f32 0.0, %v2273
      %2275 = vmatmul.bf16.gmra.mxu0 %v1345
      %v2276 = vpop.f32.mrf.mxu0
      %v2277 = vadd.f32 0.0, %v2276
      %v2278 = vpop.f32.mrf.mxu0
      %v2279 = vadd.f32 0.0, %v2278
      %2280 = vmatmul.bf16.gmra.mxu0 %v1348
      %v2281 = vpop.f32.mrf.mxu0
      %v2282 = vadd.f32 0.0, %v2281
      %v2283 = vpop.f32.mrf.mxu0
      %v2284 = vadd.f32 0.0, %v2283
      %2285 = vmatmul.bf16.gmra.mxu0 %v1351
      %v2286 = vpop.f32.mrf.mxu0
      %v2287 = vadd.f32 0.0, %v2286
      %v2288 = vpop.f32.mrf.mxu0
      %v2289 = vadd.f32 0.0, %v2288
      %2290 = vmatmul.bf16.gmra.mxu0 %v1354
      %v2291 = vpop.f32.mrf.mxu0
      %v2292 = vadd.f32 0.0, %v2291
      %v2293 = vpop.f32.mrf.mxu0
      %v2294 = vadd.f32 0.0, %v2293
      %2295 = vmatmul.bf16.gmra.mxu0 %v1357
      %v2296 = vpop.f32.mrf.mxu0
      %v2297 = vadd.f32 0.0, %v2296
      %v2298 = vpop.f32.mrf.mxu0
      %v2299 = vadd.f32 0.0, %v2298
      %2300 = vmatmul.bf16.gmra.mxu0 %v1787
      %v2301 = vpop.f32.mrf.mxu0
      %v2302 = vadd.f32 0.0, %v2301
      %v2303 = vpop.f32.mrf.mxu0
      %v2304 = vadd.f32 0.0, %v2303
      %2305 = vmatmul.bf16.gmra.mxu0 %v2217
      %v2306 = vpop.f32.mrf.mxu0
      %v2307 = vadd.f32 0.0, %v2306
      %v2308 = vpop.f32.mrf.mxu0
      %v2309 = vadd.f32 0.0, %v2308
      %2310 = vdwg.mxu0
      %v2311 = vadd.f32 %v2171, %v2232
      %v2312 = vadd.f32 %v2172, %v2234
      %v2313 = vadd.f32 %v2173, %v2237
      %v2314 = vadd.f32 %v2174, %v2239
      %v2315 = vadd.f32 %v2175, %v2242
      %v2316 = vadd.f32 %v2176, %v2244
      %v2317 = vadd.f32 %v2177, %v2247
      %v2318 = vadd.f32 %v2178, %v2249
      %v2319 = vadd.f32 %v2179, %v2252
      %v2320 = vadd.f32 %v2180, %v2254
      %v2321 = vadd.f32 %v2181, %v2257
      %v2322 = vadd.f32 %v2182, %v2259
      %v2323 = vadd.f32 %v2183, %v2262
      %v2324 = vadd.f32 %v2184, %v2264
      %v2325 = vadd.f32 %v2185, %v2267
      %v2326 = vadd.f32 %v2186, %v2269
      %v2327 = vadd.f32 %v2187, %v2272
      %v2328 = vadd.f32 %v2188, %v2274
      %v2329 = vadd.f32 %v2189, %v2277
      %v2330 = vadd.f32 %v2190, %v2279
      %v2331 = vadd.f32 %v2191, %v2282
      %v2332 = vadd.f32 %v2192, %v2284
      %v2333 = vadd.f32 %v2193, %v2287
      %v2334 = vadd.f32 %v2194, %v2289
      %v2335 = vadd.f32 %v2195, %v2292
      %v2336 = vadd.f32 %v2196, %v2294
      %v2337 = vadd.f32 %v2197, %v2297
      %v2338 = vadd.f32 %v2198, %v2299
      %v2339 = vadd.f32 %v2199, %v2302
      %v2340 = vadd.f32 %v2200, %v2304
      %v2341 = vadd.f32 %v2201, %v2307
      %v2342 = vadd.f32 %v2202, %v2309
      %vm2343 = vcmp.ge.f32.partialorder %v2311, 0.0
      %vm2344 = vcmp.ge.f32.partialorder %v2312, 0.0
      %vm2345 = vcmp.ge.f32.partialorder %v2313, 0.0
      %vm2346 = vcmp.ge.f32.partialorder %v2314, 0.0
      %vm2347 = vcmp.ge.f32.partialorder %v2315, 0.0
      %vm2348 = vcmp.ge.f32.partialorder %v2316, 0.0
      %vm2349 = vcmp.ge.f32.partialorder %v2317, 0.0
      %vm2350 = vcmp.ge.f32.partialorder %v2318, 0.0
      %vm2351 = vcmp.ge.f32.partialorder %v2319, 0.0
      %vm2352 = vcmp.ge.f32.partialorder %v2320, 0.0
      %vm2353 = vcmp.ge.f32.partialorder %v2321, 0.0
      %vm2354 = vcmp.ge.f32.partialorder %v2322, 0.0
      %vm2355 = vcmp.ge.f32.partialorder %v2323, 0.0
      %vm2356 = vcmp.ge.f32.partialorder %v2324, 0.0
      %vm2357 = vcmp.ge.f32.partialorder %v2325, 0.0
      %vm2358 = vcmp.ge.f32.partialorder %v2326, 0.0
      %vm2359 = vcmp.ge.f32.partialorder %v2327, 0.0
      %vm2360 = vcmp.ge.f32.partialorder %v2328, 0.0
      %vm2361 = vcmp.ge.f32.partialorder %v2329, 0.0
      %vm2362 = vcmp.ge.f32.partialorder %v2330, 0.0
      %vm2363 = vcmp.ge.f32.partialorder %v2331, 0.0
      %vm2364 = vcmp.ge.f32.partialorder %v2332, 0.0
      %vm2365 = vcmp.ge.f32.partialorder %v2333, 0.0
      %vm2366 = vcmp.ge.f32.partialorder %v2334, 0.0
      %vm2367 = vcmp.ge.f32.partialorder %v2335, 0.0
      %vm2368 = vcmp.ge.f32.partialorder %v2336, 0.0
      %vm2369 = vcmp.ge.f32.partialorder %v2337, 0.0
      %vm2370 = vcmp.ge.f32.partialorder %v2338, 0.0
      %vm2371 = vcmp.ge.f32.partialorder %v2339, 0.0
      %vm2372 = vcmp.ge.f32.partialorder %v2340, 0.0
      %vm2373 = vcmp.ge.f32.partialorder %v2341, 0.0
      %vm2374 = vcmp.ge.f32.partialorder %v2342, 0.0
      %v2375 = vmul.f32 %v2311, 0.2
      %v2376 = vmul.f32 %v2312, 0.2
      %v2377 = vmul.f32 %v2313, 0.2
      %v2378 = vmul.f32 %v2314, 0.2
      %v2379 = vmul.f32 %v2315, 0.2
      %v2380 = vmul.f32 %v2316, 0.2
      %v2381 = vmul.f32 %v2317, 0.2
      %v2382 = vmul.f32 %v2318, 0.2
      %v2383 = vmul.f32 %v2319, 0.2
      %v2384 = vmul.f32 %v2320, 0.2
      %v2385 = vmul.f32 %v2321, 0.2
      %v2386 = vmul.f32 %v2322, 0.2
      %v2387 = vmul.f32 %v2323, 0.2
      %v2388 = vmul.f32 %v2324, 0.2
      %v2389 = vmul.f32 %v2325, 0.2
      %v2390 = vmul.f32 %v2326, 0.2
      %v2391 = vmul.f32 %v2327, 0.2
      %v2392 = vmul.f32 %v2328, 0.2
      %v2393 = vmul.f32 %v2329, 0.2
      %v2394 = vmul.f32 %v2330, 0.2
      %v2395 = vmul.f32 %v2331, 0.2
      %v2396 = vmul.f32 %v2332, 0.2
      %v2397 = vmul.f32 %v2333, 0.2
      %v2398 = vmul.f32 %v2334, 0.2
      %v2399 = vmul.f32 %v2335, 0.2
      %v2400 = vmul.f32 %v2336, 0.2
      %v2401 = vmul.f32 %v2337, 0.2
      %v2402 = vmul.f32 %v2338, 0.2
      %v2403 = vmul.f32 %v2339, 0.2
      %v2404 = vmul.f32 %v2340, 0.2
      %v2405 = vmul.f32 %v2341, 0.2
      %v2406 = vmul.f32 %v2342, 0.2
      %v2407 = vsel %vm2343, %v2311, %v2375
      %v2408 = vsel %vm2344, %v2312, %v2376
      %v2409 = vsel %vm2345, %v2313, %v2377
      %v2410 = vsel %vm2346, %v2314, %v2378
      %v2411 = vsel %vm2347, %v2315, %v2379
      %v2412 = vsel %vm2348, %v2316, %v2380
      %v2413 = vsel %vm2349, %v2317, %v2381
      %v2414 = vsel %vm2350, %v2318, %v2382
      %v2415 = vsel %vm2351, %v2319, %v2383
      %v2416 = vsel %vm2352, %v2320, %v2384
      %v2417 = vsel %vm2353, %v2321, %v2385
      %v2418 = vsel %vm2354, %v2322, %v2386
      %v2419 = vsel %vm2355, %v2323, %v2387
      %v2420 = vsel %vm2356, %v2324, %v2388
      %v2421 = vsel %vm2357, %v2325, %v2389
      %v2422 = vsel %vm2358, %v2326, %v2390
      %v2423 = vsel %vm2359, %v2327, %v2391
      %v2424 = vsel %vm2360, %v2328, %v2392
      %v2425 = vsel %vm2361, %v2329, %v2393
      %v2426 = vsel %vm2362, %v2330, %v2394
      %v2427 = vsel %vm2363, %v2331, %v2395
      %v2428 = vsel %vm2364, %v2332, %v2396
      %v2429 = vsel %vm2365, %v2333, %v2397
      %v2430 = vsel %vm2366, %v2334, %v2398
      %v2431 = vsel %vm2367, %v2335, %v2399
      %v2432 = vsel %vm2368, %v2336, %v2400
      %v2433 = vsel %vm2369, %v2337, %v2401
      %v2434 = vsel %vm2370, %v2338, %v2402
      %v2435 = vsel %vm2371, %v2339, %v2403
      %v2436 = vsel %vm2372, %v2340, %v2404
      %v2437 = vsel %vm2373, %v2341, %v2405
      %v2438 = vsel %vm2374, %v2342, %v2406
      %v2439 = vpack.c.bf16 %v2407, %v2407
      %v2440 = vpack.c.bf16 %v2408, %v2408
      %v2441 = vpack.c.bf16 %v2409, %v2409
      %v2442 = vpack.c.bf16 %v2410, %v2410
      %v2443 = vpack.c.bf16 %v2411, %v2411
      %v2444 = vpack.c.bf16 %v2412, %v2412
      %v2445 = vpack.c.bf16 %v2413, %v2413
      %v2446 = vpack.c.bf16 %v2414, %v2414
      %v2447 = vpack.c.bf16 %v2415, %v2415
      %v2448 = vpack.c.bf16 %v2416, %v2416
      %v2449 = vpack.c.bf16 %v2417, %v2417
      %v2450 = vpack.c.bf16 %v2418, %v2418
      %v2451 = vpack.c.bf16 %v2419, %v2419
      %v2452 = vpack.c.bf16 %v2420, %v2420
      %v2453 = vpack.c.bf16 %v2421, %v2421
      %v2454 = vpack.c.bf16 %v2422, %v2422
      %v2455 = vpack.c.bf16 %v2423, %v2423
      %v2456 = vpack.c.bf16 %v2424, %v2424
      %v2457 = vpack.c.bf16 %v2425, %v2425
      %v2458 = vpack.c.bf16 %v2426, %v2426
      %v2459 = vpack.c.bf16 %v2427, %v2427
      %v2460 = vpack.c.bf16 %v2428, %v2428
      %v2461 = vpack.c.bf16 %v2429, %v2429
      %v2462 = vpack.c.bf16 %v2430, %v2430
      %v2463 = vpack.c.bf16 %v2431, %v2431
      %v2464 = vpack.c.bf16 %v2432, %v2432
      %v2465 = vpack.c.bf16 %v2433, %v2433
      %v2466 = vpack.c.bf16 %v2434, %v2434
      %v2467 = vpack.c.bf16 %v2435, %v2435
      %v2468 = vpack.c.bf16 %v2436, %v2436
      %v2469 = vpack.c.bf16 %v2437, %v2437
      %v2470 = vpack.c.bf16 %v2438, %v2438
      %vm2471 = vcmask 60416
      %2472 = vst.msk [vmem:[%s206] sm:$0xf] %vm2471, %v2439
      %2473 = vst.msk [vmem:[%s206 + $0x4] sm:$0xf] %vm2471, %v2440
      %2474 = vst.msk [vmem:[%s206 + $0x8] sm:$0xf] %vm2471, %v2441
      %2475 = vst.msk [vmem:[%s206 + $0xc] sm:$0xf] %vm2471, %v2442
      %2476 = vst.msk [vmem:[%s206 + $0x10] sm:$0xf] %vm2471, %v2443
      %2477 = vst.msk [vmem:[%s206 + $0x14] sm:$0xf] %vm2471, %v2444
      %2478 = vst.msk [vmem:[%s206 + $0x18] sm:$0xf] %vm2471, %v2445
      %2479 = vst.msk [vmem:[%s206 + $0x1c] sm:$0xf] %vm2471, %v2446
      %2480 = vst.msk [vmem:[%s206 + $0x20] sm:$0xf] %vm2471, %v2447
      %2481 = vst.msk [vmem:[%s206 + $0x24] sm:$0xf] %vm2471, %v2448
      %2482 = vst.msk [vmem:[%s206 + $0x28] sm:$0xf] %vm2471, %v2449
      %2483 = vst.msk [vmem:[%s206 + $0x2c] sm:$0xf] %vm2471, %v2450
      %2484 = vst.msk [vmem:[%s206 + $0x30] sm:$0xf] %vm2471, %v2451
      %2485 = vst.msk [vmem:[%s206 + $0x34] sm:$0xf] %vm2471, %v2452
      %2486 = vst.msk [vmem:[%s206 + $0x38] sm:$0xf] %vm2471, %v2453
      %2487 = vst.msk [vmem:[%s206 + $0x3c] sm:$0xf] %vm2471, %v2454
      %2488 = vst.msk [vmem:[%s206 + $0x40] sm:$0xf] %vm2471, %v2455
      %2489 = vst.msk [vmem:[%s206 + $0x44] sm:$0xf] %vm2471, %v2456
      %2490 = vst.msk [vmem:[%s206 + $0x48] sm:$0xf] %vm2471, %v2457
      %2491 = vst.msk [vmem:[%s206 + $0x4c] sm:$0xf] %vm2471, %v2458
      %2492 = vst.msk [vmem:[%s206 + $0x50] sm:$0xf] %vm2471, %v2459
      %2493 = vst.msk [vmem:[%s206 + $0x54] sm:$0xf] %vm2471, %v2460
      %2494 = vst.msk [vmem:[%s206 + $0x58] sm:$0xf] %vm2471, %v2461
      %2495 = vst.msk [vmem:[%s206 + $0x5c] sm:$0xf] %vm2471, %v2462
      %2496 = vst.msk [vmem:[%s206 + $0x60] sm:$0xf] %vm2471, %v2463
      %2497 = vst.msk [vmem:[%s206 + $0x64] sm:$0xf] %vm2471, %v2464
      %2498 = vst.msk [vmem:[%s206 + $0x68] sm:$0xf] %vm2471, %v2465
      %2499 = vst.msk [vmem:[%s206 + $0x6c] sm:$0xf] %vm2471, %v2466
      %2500 = vst.msk [vmem:[%s206 + $0x70] sm:$0xf] %vm2471, %v2467
      %2501 = vst.msk [vmem:[%s206 + $0x74] sm:$0xf] %vm2471, %v2468
      %2502 = vst.msk [vmem:[%s206 + $0x78] sm:$0xf] %vm2471, %v2469
      %2503 = vst.msk [vmem:[%s206 + $0x7c] sm:$0xf] %vm2471, %v2470
      %p2504 = scmp.lt.s32.totalorder %s18, 1
      %s2505 = scalar_select %p2504, %s18, 1
      %p2506 = scmp.lt.s32.totalorder %s19, 0
      %s2507 = scalar_select %p2506, %s19, 0
      %s2508 = smul.addr %s2507, 32
      %s2509 = smul.addr %s2505, 32
      %s2510 = sadd.s32 %s2508, %s2509
      %s2511 = smul.addr %s2510, 4
      %s2512 = scalar_lea.vmem %s3, %s2511
      // Predicated region
      $region33: #{tpu_custom_call.1} parent=31 // pred_check
        %p2513 = pneg %p116
      $region34: #{tpu_custom_call.1} parent=31 // pred_check_branch
        %2515 = sbr.rel (%p2513) target = $region36
      $region35: #{tpu_custom_call.1} parent=31 // pred_region
        _
      $region36: #{tpu_custom_call.1} parent=31 // pred_fallthru
        _
    $region32: #{tpu_custom_call.1} parent=5 // pred_fallthru
      _
    %p2516 = scmp.le.s32.totalorder 2, %s9
    // Predicated region
    $region37: #{tpu_custom_call.1} parent=5 // pred_check
      %p2517 = pneg %p2516
    $region38: #{tpu_custom_call.1} parent=5 // pred_check_branch
      %2519 = sbr.rel (%p2517) target = $region40
    $region39: #{tpu_custom_call.1} parent=5 // pred_region
      %s2520 = ssub.s32 %s9, 2
      // Predicated region
      $region41: #{tpu_custom_call.1} parent=39 // pred_check
        %p2521 = pneg %p122
      $region42: #{tpu_custom_call.1} parent=39 // pred_check_branch
        %2523 = sbr.rel (%p2521) target = $region44
      $region43: #{tpu_custom_call.1} parent=39 // pred_region
        %p2524 = scmp.lt.s32.totalorder %s20, 1
        %s2525 = scalar_select %p2524, %s20, 1
        %p2526 = scmp.lt.s32.totalorder %s21, 0
        %s2527 = scalar_select %p2526, %s21, 0
        %s2528 = smul.addr %s2527, 32
        %s2529 = smul.addr %s2525, 32
        %s2530 = sadd.s32 %s2528, %s2529
        %s2531 = smul.addr %s2530, 4
        %s2532 = scalar_lea.vmem %s3, %s2531
      $region44: #{tpu_custom_call.1} parent=39 // pred_fallthru
        _
    $region40: #{tpu_custom_call.1} parent=5 // pred_fallthru
      _
  $region6: #{tpu_custom_call.1} parent=0 // loop_footer
    %s13 = sadd.s32 1, %s9
  $region7: #{tpu_custom_call.1} parent=0 // loop_footer_branch
    %8 = sbr.rel target = $region3
  $region8: #{tpu_custom_call.1} parent=0 // loop_exit
    _

</llo_original>
